<compile_context>
chip_gen: v6e
topology: v6e:2x2x1
jax: 0.10.0
libtpu: 0.0.40
codegen_flags: <defaults>
</compile_context>

<pallas_src>
import functools

import jax
import jax.numpy as jnp
from jax.experimental import pallas as pl
from jax.experimental.pallas import tpu as pltpu


_VMEM_LIMIT = 48 * 1024 * 1024   # safe on v5e/v6e (128 MiB) and v7x (64 MiB)


# ----------------------------- helpers -----------------------------

def _token_tile(T):
    """Token-tile size: multiple of 16 (bf16 sublane packing), large tiles
    preferred, >= 4 grid steps when possible (2 per TensorCore on v7x)."""
    for cand in (512, 256, 128, 64, 32, 16):
        if T % cand == 0 and T // cand >= 4:
            return cand
    for cand in (512, 256, 128, 64, 32, 16):
        if T % cand == 0:
            return cand
    return T


# ----------------------------- Pallas kernels -----------------------------

def _ln_kernel(x_ref, g_ref, b_ref, o_ref, *, eps):
    """o = LayerNorm(x) over the last dim (no residual)."""
    h = x_ref[...].astype(jnp.float32)
    mu = jnp.mean(h, axis=-1, keepdims=True)
    var = jnp.mean((h - mu) ** 2, axis=-1, keepdims=True)
    inv = jax.lax.rsqrt(var + eps)
    o_ref[...] = (((h - mu) * inv) * g_ref[...] + b_ref[...]).astype(o_ref.dtype)


def layernorm(x, gamma, beta, eps=1e-12):
    T, H = x.shape
    tm = _token_tile(T)
    return pl.pallas_call(
        functools.partial(_ln_kernel, eps=eps),
        out_shape=jax.ShapeDtypeStruct((T, H), jnp.bfloat16),
        grid=(T // tm,),
        in_specs=[pl.BlockSpec((tm, H), lambda i: (i, 0)),
                  pl.BlockSpec((1, H), lambda i: (0, 0)),
                  pl.BlockSpec((1, H), lambda i: (0, 0))],
        out_specs=pl.BlockSpec((tm, H), lambda i: (i, 0)),
        compiler_params=pltpu.CompilerParams(dimension_semantics=("parallel",)),
    )(x, gamma.reshape(1, H), beta.reshape(1, H))


def _attn_block_kernel(x_ref, wqkv_ref, bqkv_ref, bias_ref, wo_ref, bo_ref,
                       g_ref, be_ref, o_ref, ctx_ref, *, n_heads, d_head, eps):
    """Whole attention block for one batch element, fully fused:

        qkv  = x @ wqkv + bqkv            (scale already folded into Q cols)
        ctx  = softmax(q k^T + mask) v     per head, stored into VMEM scratch
        o    = LayerNorm(ctx @ wo + bo + x)

    The [S, 3H] QKV and the [S, H] context never leave VMEM.
    """
    x = x_ref[...]                                               # (S, H) bf16
    H = n_heads * d_head
    qkv = (jnp.dot(x, wqkv_ref[...], preferred_element_type=jnp.float32)
           + bqkv_ref[...]).astype(x.dtype)                      # (S, 3H) bf16
    bias = bias_ref[0]                                           # (1, S) fp32

    for h in range(n_heads):
        q = qkv[:, h * d_head:(h + 1) * d_head]                  # (S, Dh)
        k = qkv[:, H + h * d_head:H + (h + 1) * d_head]          # (S, Dh)
        v = qkv[:, 2 * H + h * d_head:2 * H + (h + 1) * d_head]  # (S, Dh)
        s = jax.lax.dot_general(q, k, (((1,), (1,)), ((), ())),
                                preferred_element_type=jnp.float32) + bias
        m = jnp.max(s, axis=-1, keepdims=True)
        p = jnp.exp(s - m)
        p = p * pl.reciprocal(jnp.sum(p, axis=-1, keepdims=True), approx=True)
        ctx = jnp.dot(p.astype(v.dtype), v, preferred_element_type=jnp.float32)
        # direct per-head store (no concatenate, no per-head fp32 live set)
        ctx_ref[:, h * d_head:(h + 1) * d_head] = ctx.astype(ctx_ref.dtype)

    # out-projection (full-K matmul) + residual add + LayerNorm epilogue
    y = (jnp.dot(ctx_ref[...], wo_ref[...], preferred_element_type=jnp.float32)
         + bo_ref[...] + x.astype(jnp.float32))
    mu = jnp.mean(y, axis=-1, keepdims=True)
    var = jnp.mean((y - mu) ** 2, axis=-1, keepdims=True)
    inv = jax.lax.rsqrt(var + eps)
    o_ref[...] = (((y - mu) * inv) * g_ref[...] + be_ref[...]).astype(o_ref.dtype)


def attention_block(x, wqkv, bqkv, mask_bias, wo, bo, gamma, beta,
                    *, n_heads, batch, eps=1e-12):
    T, H = x.shape
    S = T // batch
    d_head = H // n_heads
    return pl.pallas_call(
        functools.partial(_attn_block_kernel,
                          n_heads=n_heads, d_head=d_head, eps=eps),
        out_shape=jax.ShapeDtypeStruct((T, H), jnp.bfloat16),
        grid=(batch,),
        in_specs=[pl.BlockSpec((S, H), lambda b: (b, 0)),
                  pl.BlockSpec((H, 3 * H), lambda b: (0, 0)),
                  pl.BlockSpec((1, 3 * H), lambda b: (0, 0)),
                  pl.BlockSpec((1, 1, S), lambda b: (b, 0, 0)),
                  pl.BlockSpec((H, H), lambda b: (0, 0)),
                  pl.BlockSpec((1, H), lambda b: (0, 0)),
                  pl.BlockSpec((1, H), lambda b: (0, 0)),
                  pl.BlockSpec((1, H), lambda b: (0, 0))],
        out_specs=pl.BlockSpec((S, H), lambda b: (b, 0)),
        scratch_shapes=[pltpu.VMEM((S, H), jnp.bfloat16)],
        input_output_aliases={0: 0},   # hidden state updated in place
        compiler_params=pltpu.CompilerParams(
            dimension_semantics=("parallel",),
            vmem_limit_bytes=_VMEM_LIMIT),
    )(x, wqkv, bqkv.reshape(1, 3 * H), mask_bias, wo, bo.reshape(1, H),
      gamma.reshape(1, H), beta.reshape(1, H))


def _ffn_ln_kernel(x_ref, w1_ref, b1_ref, w2_ref, b2_ref, g_ref, be_ref, o_ref,
                   *, eps):
    """o = LayerNorm(GELU(x @ w1 + b1) @ w2 + b2 + x); intermediate stays in VMEM."""
    x = x_ref[...]
    h = jnp.dot(x, w1_ref[...], preferred_element_type=jnp.float32) + b1_ref[...]
    # TODO(synk): BERT uses exact erf-GELU; tanh approximation used here.
    # bf16 intermediate (bf16 VPU/EUP on v6e/v7x); matmul accumulations stay fp32.
    h = jax.nn.gelu(h.astype(jnp.bfloat16), approximate=True)
    y = jnp.dot(h, w2_ref[...], preferred_element_type=jnp.float32) + b2_ref[...]
    y = y + x.astype(jnp.float32)
    mu = jnp.mean(y, axis=-1, keepdims=True)
    var = jnp.mean((y - mu) ** 2, axis=-1, keepdims=True)
    inv = jax.lax.rsqrt(var + eps)
    o_ref[...] = (((y - mu) * inv) * g_ref[...] + be_ref[...]).astype(o_ref.dtype)


def ffn_ln(x, w1, b1, w2, b2, gamma, beta, eps=1e-12):
    T, H = x.shape
    I = w1.shape[1]
    tm = _token_tile(T)
    return pl.pallas_call(
        functools.partial(_ffn_ln_kernel, eps=eps),
        out_shape=jax.ShapeDtypeStruct((T, H), jnp.bfloat16),
        grid=(T // tm,),
        in_specs=[pl.BlockSpec((tm, H), lambda i: (i, 0)),
                  pl.BlockSpec((H, I), lambda i: (0, 0)),
                  pl.BlockSpec((1, I), lambda i: (0, 0)),
                  pl.BlockSpec((I, H), lambda i: (0, 0)),
                  pl.BlockSpec((1, H), lambda i: (0, 0)),
                  pl.BlockSpec((1, H), lambda i: (0, 0)),
                  pl.BlockSpec((1, H), lambda i: (0, 0))],
        out_specs=pl.BlockSpec((tm, H), lambda i: (i, 0)),
        input_output_aliases={0: 0},   # hidden state updated in place
        compiler_params=pltpu.CompilerParams(
            dimension_semantics=("parallel",),
            vmem_limit_bytes=_VMEM_LIMIT),
    )(x, w1, b1.reshape(1, I), w2, b2.reshape(1, H),
      gamma.reshape(1, H), beta.reshape(1, H))


def _head_kernel(x_ref, pw_ref, pb_ref, aw_ref, ab_ref, o_ref):
    """o = ReLU(tanh(cls @ pool_w + pool_b) @ adapt_w + adapt_b)."""
    pooled = jnp.tanh(
        jnp.dot(x_ref[...], pw_ref[...], preferred_element_type=jnp.float32)
        + pb_ref[...])
    y = jnp.dot(pooled.astype(aw_ref.dtype), aw_ref[...],
                preferred_element_type=jnp.float32) + ab_ref[...]
    o_ref[...] = jnp.maximum(y, 0.0)


def pooler_head(cls_tok, pool_w, pool_b, adapt_w, adapt_b):
    B, H = cls_tok.shape
    out_dim = adapt_w.shape[1]
    vmem = pl.BlockSpec(memory_space=pltpu.MemorySpace.VMEM)
    return pl.pallas_call(
        _head_kernel,
        out_shape=jax.ShapeDtypeStruct((B, out_dim), jnp.float32),
        in_specs=[vmem] * 5,
        out_specs=vmem,
    )(cls_tok, pool_w, pool_b.reshape(1, H), adapt_w, adapt_b.reshape(1, out_dim))


# ----------------------------- Model (glue) -----------------------------

def init_params(key, *, vocab, max_pos, H, nH, I, L, out_dim):
    keys = iter(jax.random.split(key, 8 + 8 * L))
    d_head = H // nH
    scale = 1.0 / float(d_head) ** 0.5

    def nrm_f32(shape):
        return 0.02 * jax.random.normal(next(keys), shape, jnp.float32)

    def nrm(shape):
        return nrm_f32(shape).astype(jnp.bfloat16)

    params = {
        # bf16 embedding tables: halves HBM gather traffic (v5e-relevant).
        "word_emb": nrm((vocab, H)),
        "pos_emb": nrm((max_pos, H)),
        "type_emb": nrm((2, H)),
        "emb_ln_g": jnp.ones((H,), jnp.float32),
        "emb_ln_b": jnp.zeros((H,), jnp.float32),
        "layers": [],
        "pool_w": nrm((H, H)),
        "pool_b": jnp.zeros((H,), jnp.float32),
        "adapt_w": nrm((H, out_dim)),
        "adapt_b": jnp.zeros((out_dim,), jnp.float32),
    }
    for _ in range(L):
        # Fold 1/sqrt(d_head) into the Q columns of the fused QKV projection
        # so the attention kernel never scales the (S, S) score matrix.
        wqkv = nrm_f32((H, 3 * H)).at[:, :H].multiply(scale)
        bqkv = jnp.zeros((3 * H,), jnp.float32).at[:H].multiply(scale)
        params["layers"].append({
            "wqkv": wqkv.astype(jnp.bfloat16), "bqkv": bqkv,
            "wo": nrm((H, H)), "bo": jnp.zeros((H,), jnp.float32),
            "ln1_g": jnp.ones((H,), jnp.float32), "ln1_b": jnp.zeros((H,), jnp.float32),
            "w1": nrm((H, I)), "b1": jnp.zeros((I,), jnp.float32),
            "w2": nrm((I, H)), "b2": jnp.zeros((H,), jnp.float32),
            "ln2_g": jnp.ones((H,), jnp.float32), "ln2_b": jnp.zeros((H,), jnp.float32),
        })
    return params


@functools.partial(jax.jit, static_argnames=("n_heads",))
def text_encoder_forward(params, input_ids, attention_mask, *, n_heads):
    """Equivalent of TextEncoder.forward({'input_ids', 'attention_mask'})."""
    B, S = input_ids.shape
    H = params["word_emb"].shape[1]

    # --- BERT embeddings (gather is XLA glue; LN is a Pallas kernel, bf16 out) ---
    emb = (params["word_emb"][input_ids].astype(jnp.float32)
           + params["pos_emb"][:S].astype(jnp.float32)[None, :, :]
           + params["type_emb"][0].astype(jnp.float32)[None, None, :])  # type_ids = 0
    x = layernorm(emb.reshape(B * S, H), params["emb_ln_g"], params["emb_ln_b"])

    # additive key mask: 0 where attended, -1e9 where masked
    mask_bias = ((1.0 - attention_mask.astype(jnp.float32)) * -1e9).reshape(B, 1, S)

    # --- transformer encoder layers (2 fused Pallas calls per layer) ---
    for layer in params["layers"]:
        x = attention_block(x, layer["wqkv"], layer["bqkv"], mask_bias,
                            layer["wo"], layer["bo"],
                            layer["ln1_g"], layer["ln1_b"],
                            n_heads=n_heads, batch=B)
        x = ffn_ln(x, layer["w1"], layer["b1"], layer["w2"], layer["b2"],
                   layer["ln2_g"], layer["ln2_b"])

    # --- pooler (tanh on CLS) + adaptation layer (Linear + ReLU), one kernel ---
    cls_tok = x.reshape(B, S, H)[:, 0, :]                        # [B, H]
    return pooler_head(cls_tok, params["pool_w"], params["pool_b"],
                       params["adapt_w"], params["adapt_b"])


# ----------------------------- main -----------------------------

if __name__ == "__main__":
    B, S = 2, 8
    VOCAB, MAX_POS = 50, 16
    H, NH, I, L, OUT_DIM = 32, 4, 64, 2, 16

    key = jax.random.PRNGKey(0)
    k_params, k_ids = jax.random.split(key)
    params = init_params(k_params, vocab=VOCAB, max_pos=MAX_POS,
                         H=H, nH=NH, I=I, L=L, out_dim=OUT_DIM)

    input_ids = jax.random.randint(k_ids, (B, S), 0, VOCAB, dtype=jnp.int32)
    attention_mask = jnp.array([[1] * S,
                                [1] * (S - 2) + [0, 0]], dtype=jnp.int32)

    out = text_encoder_forward(params, input_ids, attention_mask, n_heads=NH)
    out = jax.block_until_ready(out)
    assert out.shape == (B, OUT_DIM), out.shape
    assert bool(jnp.all(out >= 0.0))   # ReLU output
    print("KERNEL_OK")
</pallas_src>

<mosaic_0001>
module attributes {stable_mosaic.version = 11 : i64} {
  func.func @_ln_kernel(%arg0: i32, %arg1: memref<16x32xf32, #tpu.memory_space<vmem>>, %arg2: memref<1x32xf32, #tpu.memory_space<vmem>>, %arg3: memref<1x32xf32, #tpu.memory_space<vmem>>, %arg4: memref<16x32xbf16, #tpu.memory_space<vmem>>) attributes {dimension_semantics = [#tpu.dimension_semantics<parallel>], iteration_bounds = array<i64: 1>, scalar_prefetch = 0 : i64, scratch_operands = 0 : i64, tpu.core_type = #tpu.core_type<tc>, window_params = [{transform_indices = @transform_0, window_bounds = array<i64: 16, 32>}, {pipeline_mode = #tpu.pipeline_mode<synchronous>, transform_indices = @transform_1, window_bounds = array<i64: 1, 32>}, {pipeline_mode = #tpu.pipeline_mode<synchronous>, transform_indices = @transform_2, window_bounds = array<i64: 1, 32>}, {transform_indices = @transform_3, window_bounds = array<i64: 16, 32>}]} {
    %c0 = arith.constant 0 : index
    %c0_0 = arith.constant 0 : index
    %0 = vector.load %arg1[%c0, %c0_0] : memref<16x32xf32, #tpu.memory_space<vmem>>, vector<16x32xf32>
    %cst = arith.constant dense<0.000000e+00> : vector<16xf32>
    %1 = vector.multi_reduction <add>, %0, %cst [1] : vector<16x32xf32> to vector<16xf32>
    %2 = vector.shape_cast %1 : vector<16xf32> to vector<16x1xf32>
    %cst_1 = arith.constant 3.200000e+01 : f32
    %3 = vector.broadcast %cst_1 : f32 to vector<16x1xf32>
    %4 = arith.divf %2, %3 : vector<16x1xf32>
    %5 = vector.broadcast %4 : vector<16x1xf32> to vector<16x32xf32>
    %6 = arith.subf %0, %5 : vector<16x32xf32>
    %7 = arith.mulf %6, %6 : vector<16x32xf32>
    %cst_2 = arith.constant dense<0.000000e+00> : vector<16xf32>
    %8 = vector.multi_reduction <add>, %7, %cst_2 [1] : vector<16x32xf32> to vector<16xf32>
    %9 = vector.shape_cast %8 : vector<16xf32> to vector<16x1xf32>
    %cst_3 = arith.constant 3.200000e+01 : f32
    %10 = vector.broadcast %cst_3 : f32 to vector<16x1xf32>
    %11 = arith.divf %9, %10 : vector<16x1xf32>
    %cst_4 = arith.constant 9.99999996E-13 : f32
    %12 = vector.broadcast %cst_4 : f32 to vector<16x1xf32>
    %13 = arith.addf %11, %12 : vector<16x1xf32>
    %14 = math.rsqrt %13 : vector<16x1xf32>
    %15 = vector.broadcast %4 : vector<16x1xf32> to vector<16x32xf32>
    %16 = arith.subf %0, %15 : vector<16x32xf32>
    %17 = vector.broadcast %14 : vector<16x1xf32> to vector<16x32xf32>
    %18 = arith.mulf %16, %17 : vector<16x32xf32>
    %c0_5 = arith.constant 0 : index
    %c0_6 = arith.constant 0 : index
    %19 = vector.load %arg2[%c0_5, %c0_6] : memref<1x32xf32, #tpu.memory_space<vmem>>, vector<1x32xf32>
    %20 = vector.broadcast %19 : vector<1x32xf32> to vector<16x32xf32>
    %21 = arith.mulf %18, %20 : vector<16x32xf32>
    %c0_7 = arith.constant 0 : index
    %c0_8 = arith.constant 0 : index
    %22 = vector.load %arg3[%c0_7, %c0_8] : memref<1x32xf32, #tpu.memory_space<vmem>>, vector<1x32xf32>
    %23 = vector.broadcast %22 : vector<1x32xf32> to vector<16x32xf32>
    %24 = arith.addf %21, %23 : vector<16x32xf32>
    %25 = arith.truncf %24 : vector<16x32xf32> to vector<16x32xbf16>
    %c0_9 = arith.constant 0 : index
    %c0_10 = arith.constant 0 : index
    %26 = vector.load %arg4[%c0_9, %c0_10] : memref<16x32xbf16, #tpu.memory_space<vmem>>, vector<16x32xbf16>
    tpu.vector_store %arg4[%c0_9, %c0_10], %25 {strides = array<i32>} : memref<16x32xbf16, #tpu.memory_space<vmem>>, vector<16x32xbf16>,
    return
  }
  func.func @transform_0(%arg0: i32) -> (i32, i32) {
    %c0_i32 = arith.constant 0 : i32
    %c0_i32_0 = arith.constant 0 : i32
    return %arg0, %c0_i32 : i32, i32
  }
  func.func @transform_1(%arg0: i32) -> (i32, i32) {
    %c0_i32 = arith.constant 0 : i32
    %c0_i32_0 = arith.constant 0 : i32
    %c0_i32_1 = arith.constant 0 : i32
    return %c0_i32, %c0_i32_0 : i32, i32
  }
  func.func @transform_2(%arg0: i32) -> (i32, i32) {
    %c0_i32 = arith.constant 0 : i32
    %c0_i32_0 = arith.constant 0 : i32
    %c0_i32_1 = arith.constant 0 : i32
    return %c0_i32, %c0_i32_0 : i32, i32
  }
  func.func @transform_3(%arg0: i32) -> (i32, i32) {
    %c0_i32 = arith.constant 0 : i32
    %c0_i32_0 = arith.constant 0 : i32
    return %arg0, %c0_i32 : i32, i32
  }
}

module attributes {stable_mosaic.version = 11 : i64} {
  func.func @_attn_block_kernel(%arg0: i32, %arg1: memref<8x32xbf16, #tpu.memory_space<vmem>>, %arg2: memref<32x96xbf16, #tpu.memory_space<vmem>>, %arg3: memref<1x96xf32, #tpu.memory_space<vmem>>, %arg4: memref<1x1x8xf32, #tpu.memory_space<vmem>>, %arg5: memref<32x32xbf16, #tpu.memory_space<vmem>>, %arg6: memref<1x32xf32, #tpu.memory_space<vmem>>, %arg7: memref<1x32xf32, #tpu.memory_space<vmem>>, %arg8: memref<1x32xf32, #tpu.memory_space<vmem>>, %arg9: memref<8x32xbf16, #tpu.memory_space<vmem>>, %arg10: memref<8x32xbf16, #tpu.memory_space<vmem>>) attributes {dimension_semantics = [#tpu.dimension_semantics<parallel>], iteration_bounds = array<i64: 2>, scalar_prefetch = 0 : i64, scratch_operands = 1 : i64, tpu.core_type = #tpu.core_type<tc>, window_params = [{transform_indices = @transform_0, window_bounds = array<i64: 8, 32>}, {pipeline_mode = #tpu.pipeline_mode<synchronous>, transform_indices = @transform_1, window_bounds = array<i64: 32, 96>}, {pipeline_mode = #tpu.pipeline_mode<synchronous>, transform_indices = @transform_2, window_bounds = array<i64: 1, 96>}, {transform_indices = @transform_3, window_bounds = array<i64: 1, 1, 8>}, {pipeline_mode = #tpu.pipeline_mode<synchronous>, transform_indices = @transform_4, window_bounds = array<i64: 32, 32>}, {pipeline_mode = #tpu.pipeline_mode<synchronous>, transform_indices = @transform_5, window_bounds = array<i64: 1, 32>}, {pipeline_mode = #tpu.pipeline_mode<synchronous>, transform_indices = @transform_6, window_bounds = array<i64: 1, 32>}, {pipeline_mode = #tpu.pipeline_mode<synchronous>, transform_indices = @transform_7, window_bounds = array<i64: 1, 32>}, {transform_indices = @transform_8, window_bounds = array<i64: 8, 32>}]} {
    %c0 = arith.constant 0 : index
    %c0_0 = arith.constant 0 : index
    %0 = vector.load %arg1[%c0, %c0_0] : memref<8x32xbf16, #tpu.memory_space<vmem>>, vector<8x32xbf16>
    %c0_1 = arith.constant 0 : index
    %c0_2 = arith.constant 0 : index
    %1 = vector.load %arg2[%c0_1, %c0_2] : memref<32x96xbf16, #tpu.memory_space<vmem>>, vector<32x96xbf16>
    %cst = arith.constant dense<0.000000e+00> : vector<8x96xf32>
    %2 = tpu.matmul %0, %1, %cst {dimension_numbers = #tpu.dot_dimension_numbers<[1], [0], [0], [1], [0, 0, 1, 1], [], []>} : vector<8x32xbf16>, vector<32x96xbf16>, vector<8x96xf32> -> vector<8x96xf32>
    %c0_3 = arith.constant 0 : index
    %c0_4 = arith.constant 0 : index
    %3 = vector.load %arg3[%c0_3, %c0_4] : memref<1x96xf32, #tpu.memory_space<vmem>>, vector<1x96xf32>
    %4 = vector.broadcast %3 : vector<1x96xf32> to vector<8x96xf32>
    %5 = arith.addf %2, %4 : vector<8x96xf32>
    %6 = arith.truncf %5 : vector<8x96xf32> to vector<8x96xbf16>
    %c0_5 = arith.constant 0 : index
    %c0_6 = arith.constant 0 : index
    %c0_7 = arith.constant 0 : index
    %7 = vector.load %arg4[%c0_5, %c0_6, %c0_7] : memref<1x1x8xf32, #tpu.memory_space<vmem>>, vector<1x1x8xf32>
    %8 = vector.shape_cast %7 : vector<1x1x8xf32> to vector<1x8xf32>
    %9 = vector.extract_strided_slice %6 {offsets = [0, 0], sizes = [8, 8], strides = [1, 1]} : vector<8x96xbf16> to vector<8x8xbf16>
    %10 = vector.extract_strided_slice %6 {offsets = [0, 32], sizes = [8, 8], strides = [1, 1]} : vector<8x96xbf16> to vector<8x8xbf16>
    %11 = vector.extract_strided_slice %6 {offsets = [0, 64], sizes = [8, 8], strides = [1, 1]} : vector<8x96xbf16> to vector<8x8xbf16>
    %cst_8 = arith.constant dense<0.000000e+00> : vector<8x8xf32>
    %12 = tpu.matmul %9, %10, %cst_8 {dimension_numbers = #tpu.dot_dimension_numbers<[1], [1], [0], [0], [0, 0, 1, 0], [], []>} : vector<8x8xbf16>, vector<8x8xbf16>, vector<8x8xf32> -> vector<8x8xf32>
    %13 = vector.broadcast %8 : vector<1x8xf32> to vector<8x8xf32>
    %14 = arith.addf %12, %13 : vector<8x8xf32>
    %cst_9 = arith.constant dense<0xFF800000> : vector<8xf32>
    %15 = vector.multi_reduction <maximumf>, %14, %cst_9 [1] : vector<8x8xf32> to vector<8xf32>
    %16 = vector.shape_cast %15 : vector<8xf32> to vector<8x1xf32>
    %17 = vector.broadcast %16 : vector<8x1xf32> to vector<8x8xf32>
    %18 = arith.subf %14, %17 : vector<8x8xf32>
    %19 = math.exp %18 : vector<8x8xf32>
    %cst_10 = arith.constant dense<0.000000e+00> : vector<8xf32>
    %20 = vector.multi_reduction <add>, %19, %cst_10 [1] : vector<8x8xf32> to vector<8xf32>
    %21 = vector.shape_cast %20 : vector<8xf32> to vector<8x1xf32>
    %22 = tpu.reciprocal %21 {approx = true} : vector<8x1xf32> -> vector<8x1xf32>
    %23 = vector.broadcast %22 : vector<8x1xf32> to vector<8x8xf32>
    %24 = arith.mulf %19, %23 : vector<8x8xf32>
    %25 = arith.truncf %24 : vector<8x8xf32> to vector<8x8xbf16>
    %cst_11 = arith.constant dense<0.000000e+00> : vector<8x8xf32>
    %26 = tpu.matmul %25, %11, %cst_11 {dimension_numbers = #tpu.dot_dimension_numbers<[1], [0], [0], [1], [0, 0, 1, 1], [], []>} : vector<8x8xbf16>, vector<8x8xbf16>, vector<8x8xf32> -> vector<8x8xf32>
    %27 = arith.truncf %26 : vector<8x8xf32> to vector<8x8xbf16>
    %c0_12 = arith.constant 0 : index
    %c0_13 = arith.constant 0 : index
    %28 = vector.load %arg10[%c0_12, %c0_13] : memref<8x32xbf16, #tpu.memory_space<vmem>>, vector<8x8xbf16>
    tpu.vector_store %arg10[%c0_12, %c0_13], %27 {strides = array<i32>} : memref<8x32xbf16, #tpu.memory_space<vmem>>, vector<8x8xbf16>,
    %29 = vector.extract_strided_slice %6 {offsets = [0, 8], sizes = [8, 8], strides = [1, 1]} : vector<8x96xbf16> to vector<8x8xbf16>
    %30 = vector.extract_strided_slice %6 {offsets = [0, 40], sizes = [8, 8], strides = [1, 1]} : vector<8x96xbf16> to vector<8x8xbf16>
    %31 = vector.extract_strided_slice %6 {offsets = [0, 72], sizes = [8, 8], strides = [1, 1]} : vector<8x96xbf16> to vector<8x8xbf16>
    %cst_14 = arith.constant dense<0.000000e+00> : vector<8x8xf32>
    %32 = tpu.matmul %29, %30, %cst_14 {dimension_numbers = #tpu.dot_dimension_numbers<[1], [1], [0], [0], [0, 0, 1, 0], [], []>} : vector<8x8xbf16>, vector<8x8xbf16>, vector<8x8xf32> -> vector<8x8xf32>
    %33 = vector.broadcast %8 : vector<1x8xf32> to vector<8x8xf32>
    %34 = arith.addf %32, %33 : vector<8x8xf32>
    %cst_15 = arith.constant dense<0xFF800000> : vector<8xf32>
    %35 = vector.multi_reduction <maximumf>, %34, %cst_15 [1] : vector<8x8xf32> to vector<8xf32>
    %36 = vector.shape_cast %35 : vector<8xf32> to vector<8x1xf32>
    %37 = vector.broadcast %36 : vector<8x1xf32> to vector<8x8xf32>
    %38 = arith.subf %34, %37 : vector<8x8xf32>
    %39 = math.exp %38 : vector<8x8xf32>
    %cst_16 = arith.constant dense<0.000000e+00> : vector<8xf32>
    %40 = vector.multi_reduction <add>, %39, %cst_16 [1] : vector<8x8xf32> to vector<8xf32>
    %41 = vector.shape_cast %40 : vector<8xf32> to vector<8x1xf32>
    %42 = tpu.reciprocal %41 {approx = true} : vector<8x1xf32> -> vector<8x1xf32>
    %43 = vector.broadcast %42 : vector<8x1xf32> to vector<8x8xf32>
    %44 = arith.mulf %39, %43 : vector<8x8xf32>
    %45 = arith.truncf %44 : vector<8x8xf32> to vector<8x8xbf16>
    %cst_17 = arith.constant dense<0.000000e+00> : vector<8x8xf32>
    %46 = tpu.matmul %45, %31, %cst_17 {dimension_numbers = #tpu.dot_dimension_numbers<[1], [0], [0], [1], [0, 0, 1, 1], [], []>} : vector<8x8xbf16>, vector<8x8xbf16>, vector<8x8xf32> -> vector<8x8xf32>
    %47 = arith.truncf %46 : vector<8x8xf32> to vector<8x8xbf16>
    %c0_18 = arith.constant 0 : index
    %c8 = arith.constant 8 : index
    %48 = vector.load %arg10[%c0_18, %c8] : memref<8x32xbf16, #tpu.memory_space<vmem>>, vector<8x8xbf16>
    tpu.vector_store %arg10[%c0_18, %c8], %47 {strides = array<i32>} : memref<8x32xbf16, #tpu.memory_space<vmem>>, vector<8x8xbf16>,
    %49 = vector.extract_strided_slice %6 {offsets = [0, 16], sizes = [8, 8], strides = [1, 1]} : vector<8x96xbf16> to vector<8x8xbf16>
    %50 = vector.extract_strided_slice %6 {offsets = [0, 48], sizes = [8, 8], strides = [1, 1]} : vector<8x96xbf16> to vector<8x8xbf16>
    %51 = vector.extract_strided_slice %6 {offsets = [0, 80], sizes = [8, 8], strides = [1, 1]} : vector<8x96xbf16> to vector<8x8xbf16>
    %cst_19 = arith.constant dense<0.000000e+00> : vector<8x8xf32>
    %52 = tpu.matmul %49, %50, %cst_19 {dimension_numbers = #tpu.dot_dimension_numbers<[1], [1], [0], [0], [0, 0, 1, 0], [], []>} : vector<8x8xbf16>, vector<8x8xbf16>, vector<8x8xf32> -> vector<8x8xf32>
    %53 = vector.broadcast %8 : vector<1x8xf32> to vector<8x8xf32>
    %54 = arith.addf %52, %53 : vector<8x8xf32>
    %cst_20 = arith.constant dense<0xFF800000> : vector<8xf32>
    %55 = vector.multi_reduction <maximumf>, %54, %cst_20 [1] : vector<8x8xf32> to vector<8xf32>
    %56 = vector.shape_cast %55 : vector<8xf32> to vector<8x1xf32>
    %57 = vector.broadcast %56 : vector<8x1xf32> to vector<8x8xf32>
    %58 = arith.subf %54, %57 : vector<8x8xf32>
    %59 = math.exp %58 : vector<8x8xf32>
    %cst_21 = arith.constant dense<0.000000e+00> : vector<8xf32>
    %60 = vector.multi_reduction <add>, %59, %cst_21 [1] : vector<8x8xf32> to vector<8xf32>
    %61 = vector.shape_cast %60 : vector<8xf32> to vector<8x1xf32>
    %62 = tpu.reciprocal %61 {approx = true} : vector<8x1xf32> -> vector<8x1xf32>
    %63 = vector.broadcast %62 : vector<8x1xf32> to vector<8x8xf32>
    %64 = arith.mulf %59, %63 : vector<8x8xf32>
    %65 = arith.truncf %64 : vector<8x8xf32> to vector<8x8xbf16>
    %cst_22 = arith.constant dense<0.000000e+00> : vector<8x8xf32>
    %66 = tpu.matmul %65, %51, %cst_22 {dimension_numbers = #tpu.dot_dimension_numbers<[1], [0], [0], [1], [0, 0, 1, 1], [], []>} : vector<8x8xbf16>, vector<8x8xbf16>, vector<8x8xf32> -> vector<8x8xf32>
    %67 = arith.truncf %66 : vector<8x8xf32> to vector<8x8xbf16>
    %c0_23 = arith.constant 0 : index
    %c16 = arith.constant 16 : index
    %68 = vector.load %arg10[%c0_23, %c16] : memref<8x32xbf16, #tpu.memory_space<vmem>>, vector<8x8xbf16>
    tpu.vector_store %arg10[%c0_23, %c16], %67 {strides = array<i32>} : memref<8x32xbf16, #tpu.memory_space<vmem>>, vector<8x8xbf16>,
    %69 = vector.extract_strided_slice %6 {offsets = [0, 24], sizes = [8, 8], strides = [1, 1]} : vector<8x96xbf16> to vector<8x8xbf16>
    %70 = vector.extract_strided_slice %6 {offsets = [0, 56], sizes = [8, 8], strides = [1, 1]} : vector<8x96xbf16> to vector<8x8xbf16>
    %71 = vector.extract_strided_slice %6 {offsets = [0, 88], sizes = [8, 8], strides = [1, 1]} : vector<8x96xbf16> to vector<8x8xbf16>
    %cst_24 = arith.constant dense<0.000000e+00> : vector<8x8xf32>
    %72 = tpu.matmul %69, %70, %cst_24 {dimension_numbers = #tpu.dot_dimension_numbers<[1], [1], [0], [0], [0, 0, 1, 0], [], []>} : vector<8x8xbf16>, vector<8x8xbf16>, vector<8x8xf32> -> vector<8x8xf32>
    %73 = vector.broadcast %8 : vector<1x8xf32> to vector<8x8xf32>
    %74 = arith.addf %72, %73 : vector<8x8xf32>
    %cst_25 = arith.constant dense<0xFF800000> : vector<8xf32>
    %75 = vector.multi_reduction <maximumf>, %74, %cst_25 [1] : vector<8x8xf32> to vector<8xf32>
    %76 = vector.shape_cast %75 : vector<8xf32> to vector<8x1xf32>
    %77 = vector.broadcast %76 : vector<8x1xf32> to vector<8x8xf32>
    %78 = arith.subf %74, %77 : vector<8x8xf32>
    %79 = math.exp %78 : vector<8x8xf32>
    %cst_26 = arith.constant dense<0.000000e+00> : vector<8xf32>
    %80 = vector.multi_reduction <add>, %79, %cst_26 [1] : vector<8x8xf32> to vector<8xf32>
    %81 = vector.shape_cast %80 : vector<8xf32> to vector<8x1xf32>
    %82 = tpu.reciprocal %81 {approx = true} : vector<8x1xf32> -> vector<8x1xf32>
    %83 = vector.broadcast %82 : vector<8x1xf32> to vector<8x8xf32>
    %84 = arith.mulf %79, %83 : vector<8x8xf32>
    %85 = arith.truncf %84 : vector<8x8xf32> to vector<8x8xbf16>
    %cst_27 = arith.constant dense<0.000000e+00> : vector<8x8xf32>
    %86 = tpu.matmul %85, %71, %cst_27 {dimension_numbers = #tpu.dot_dimension_numbers<[1], [0], [0], [1], [0, 0, 1, 1], [], []>} : vector<8x8xbf16>, vector<8x8xbf16>, vector<8x8xf32> -> vector<8x8xf32>
    %87 = arith.truncf %86 : vector<8x8xf32> to vector<8x8xbf16>
    %c0_28 = arith.constant 0 : index
    %c24 = arith.constant 24 : index
    %88 = vector.load %arg10[%c0_28, %c24] : memref<8x32xbf16, #tpu.memory_space<vmem>>, vector<8x8xbf16>
    tpu.vector_store %arg10[%c0_28, %c24], %87 {strides = array<i32>} : memref<8x32xbf16, #tpu.memory_space<vmem>>, vector<8x8xbf16>,
    %c0_29 = arith.constant 0 : index
    %c0_30 = arith.constant 0 : index
    %89 = vector.load %arg10[%c0_29, %c0_30] : memref<8x32xbf16, #tpu.memory_space<vmem>>, vector<8x32xbf16>
    %c0_31 = arith.constant 0 : index
    %c0_32 = arith.constant 0 : index
    %90 = vector.load %arg5[%c0_31, %c0_32] : memref<32x32xbf16, #tpu.memory_space<vmem>>, vector<32x32xbf16>
    %cst_33 = arith.constant dense<0.000000e+00> : vector<8x32xf32>
    %91 = tpu.matmul %89, %90, %cst_33 {dimension_numbers = #tpu.dot_dimension_numbers<[1], [0], [0], [1], [0, 0, 1, 1], [], []>} : vector<8x32xbf16>, vector<32x32xbf16>, vector<8x32xf32> -> vector<8x32xf32>
    %c0_34 = arith.constant 0 : index
    %c0_35 = arith.constant 0 : index
    %92 = vector.load %arg6[%c0_34, %c0_35] : memref<1x32xf32, #tpu.memory_space<vmem>>, vector<1x32xf32>
    %93 = vector.broadcast %92 : vector<1x32xf32> to vector<8x32xf32>
    %94 = arith.addf %91, %93 : vector<8x32xf32>
    %95 = arith.extf %0 : vector<8x32xbf16> to vector<8x32xf32>
    %96 = arith.addf %94, %95 : vector<8x32xf32>
    %cst_36 = arith.constant dense<0.000000e+00> : vector<8xf32>
    %97 = vector.multi_reduction <add>, %96, %cst_36 [1] : vector<8x32xf32> to vector<8xf32>
    %98 = vector.shape_cast %97 : vector<8xf32> to vector<8x1xf32>
    %cst_37 = arith.constant 3.200000e+01 : f32
    %99 = vector.broadcast %cst_37 : f32 to vector<8x1xf32>
    %100 = arith.divf %98, %99 : vector<8x1xf32>
    %101 = vector.broadcast %100 : vector<8x1xf32> to vector<8x32xf32>
    %102 = arith.subf %96, %101 : vector<8x32xf32>
    %103 = arith.mulf %102, %102 : vector<8x32xf32>
    %cst_38 = arith.constant dense<0.000000e+00> : vector<8xf32>
    %104 = vector.multi_reduction <add>, %103, %cst_38 [1] : vector<8x32xf32> to vector<8xf32>
    %105 = vector.shape_cast %104 : vector<8xf32> to vector<8x1xf32>
    %cst_39 = arith.constant 3.200000e+01 : f32
    %106 = vector.broadcast %cst_39 : f32 to vector<8x1xf32>
    %107 = arith.divf %105, %106 : vector<8x1xf32>
    %cst_40 = arith.constant 9.99999996E-13 : f32
    %108 = vector.broadcast %cst_40 : f32 to vector<8x1xf32>
    %109 = arith.addf %107, %108 : vector<8x1xf32>
    %110 = math.rsqrt %109 : vector<8x1xf32>
    %111 = vector.broadcast %100 : vector<8x1xf32> to vector<8x32xf32>
    %112 = arith.subf %96, %111 : vector<8x32xf32>
    %113 = vector.broadcast %110 : vector<8x1xf32> to vector<8x32xf32>
    %114 = arith.mulf %112, %113 : vector<8x32xf32>
    %c0_41 = arith.constant 0 : index
    %c0_42 = arith.constant 0 : index
    %115 = vector.load %arg7[%c0_41, %c0_42] : memref<1x32xf32, #tpu.memory_space<vmem>>, vector<1x32xf32>
    %116 = vector.broadcast %115 : vector<1x32xf32> to vector<8x32xf32>
    %117 = arith.mulf %114, %116 : vector<8x32xf32>
    %c0_43 = arith.constant 0 : index
    %c0_44 = arith.constant 0 : index
    %118 = vector.load %arg8[%c0_43, %c0_44] : memref<1x32xf32, #tpu.memory_space<vmem>>, vector<1x32xf32>
    %119 = vector.broadcast %118 : vector<1x32xf32> to vector<8x32xf32>
    %120 = arith.addf %117, %119 : vector<8x32xf32>
    %121 = arith.truncf %120 : vector<8x32xf32> to vector<8x32xbf16>
    %c0_45 = arith.constant 0 : index
    %c0_46 = arith.constant 0 : index
    %122 = vector.load %arg9[%c0_45, %c0_46] : memref<8x32xbf16, #tpu.memory_space<vmem>>, vector<8x32xbf16>
    tpu.vector_store %arg9[%c0_45, %c0_46], %121 {strides = array<i32>} : memref<8x32xbf16, #tpu.memory_space<vmem>>, vector<8x32xbf16>,
    return
  }
  func.func @transform_0(%arg0: i32) -> (i32, i32) {
    %c0_i32 = arith.constant 0 : i32
    %c0_i32_0 = arith.constant 0 : i32
    return %arg0, %c0_i32 : i32, i32
  }
  func.func @transform_1(%arg0: i32) -> (i32, i32) {
    %c0_i32 = arith.constant 0 : i32
    %c0_i32_0 = arith.constant 0 : i32
    %c0_i32_1 = arith.constant 0 : i32
    return %c0_i32, %c0_i32_0 : i32, i32
  }
  func.func @transform_2(%arg0: i32) -> (i32, i32) {
    %c0_i32 = arith.constant 0 : i32
    %c0_i32_0 = arith.constant 0 : i32
    %c0_i32_1 = arith.constant 0 : i32
    return %c0_i32, %c0_i32_0 : i32, i32
  }
  func.func @transform_3(%arg0: i32) -> (i32, i32, i32) {
    %c0_i32 = arith.constant 0 : i32
    %c0_i32_0 = arith.constant 0 : i32
    %c0_i32_1 = arith.constant 0 : i32
    return %arg0, %c0_i32, %c0_i32_0 : i32, i32, i32
  }
  func.func @transform_4(%arg0: i32) -> (i32, i32) {
    %c0_i32 = arith.constant 0 : i32
    %c0_i32_0 = arith.constant 0 : i32
    %c0_i32_1 = arith.constant 0 : i32
    return %c0_i32, %c0_i32_0 : i32, i32
  }
  func.func @transform_5(%arg0: i32) -> (i32, i32) {
    %c0_i32 = arith.constant 0 : i32
    %c0_i32_0 = arith.constant 0 : i32
    %c0_i32_1 = arith.constant 0 : i32
    return %c0_i32, %c0_i32_0 : i32, i32
  }
  func.func @transform_6(%arg0: i32) -> (i32, i32) {
    %c0_i32 = arith.constant 0 : i32
    %c0_i32_0 = arith.constant 0 : i32
    %c0_i32_1 = arith.constant 0 : i32
    return %c0_i32, %c0_i32_0 : i32, i32
  }
  func.func @transform_7(%arg0: i32) -> (i32, i32) {
    %c0_i32 = arith.constant 0 : i32
    %c0_i32_0 = arith.constant 0 : i32
    %c0_i32_1 = arith.constant 0 : i32
    return %c0_i32, %c0_i32_0 : i32, i32
  }
  func.func @transform_8(%arg0: i32) -> (i32, i32) {
    %c0_i32 = arith.constant 0 : i32
    %c0_i32_0 = arith.constant 0 : i32
    return %arg0, %c0_i32 : i32, i32
  }
}

module attributes {stable_mosaic.version = 11 : i64} {
  func.func @_ffn_ln_kernel(%arg0: i32, %arg1: memref<16x32xbf16, #tpu.memory_space<vmem>>, %arg2: memref<32x64xbf16, #tpu.memory_space<vmem>>, %arg3: memref<1x64xf32, #tpu.memory_space<vmem>>, %arg4: memref<64x32xbf16, #tpu.memory_space<vmem>>, %arg5: memref<1x32xf32, #tpu.memory_space<vmem>>, %arg6: memref<1x32xf32, #tpu.memory_space<vmem>>, %arg7: memref<1x32xf32, #tpu.memory_space<vmem>>, %arg8: memref<16x32xbf16, #tpu.memory_space<vmem>>) attributes {dimension_semantics = [#tpu.dimension_semantics<parallel>], iteration_bounds = array<i64: 1>, scalar_prefetch = 0 : i64, scratch_operands = 0 : i64, tpu.core_type = #tpu.core_type<tc>, window_params = [{transform_indices = @transform_0, window_bounds = array<i64: 16, 32>}, {pipeline_mode = #tpu.pipeline_mode<synchronous>, transform_indices = @transform_1, window_bounds = array<i64: 32, 64>}, {pipeline_mode = #tpu.pipeline_mode<synchronous>, transform_indices = @transform_2, window_bounds = array<i64: 1, 64>}, {pipeline_mode = #tpu.pipeline_mode<synchronous>, transform_indices = @transform_3, window_bounds = array<i64: 64, 32>}, {pipeline_mode = #tpu.pipeline_mode<synchronous>, transform_indices = @transform_4, window_bounds = array<i64: 1, 32>}, {pipeline_mode = #tpu.pipeline_mode<synchronous>, transform_indices = @transform_5, window_bounds = array<i64: 1, 32>}, {pipeline_mode = #tpu.pipeline_mode<synchronous>, transform_indices = @transform_6, window_bounds = array<i64: 1, 32>}, {transform_indices = @transform_7, window_bounds = array<i64: 16, 32>}]} {
    %c0 = arith.constant 0 : index
    %c0_0 = arith.constant 0 : index
    %0 = vector.load %arg1[%c0, %c0_0] : memref<16x32xbf16, #tpu.memory_space<vmem>>, vector<16x32xbf16>
    %c0_1 = arith.constant 0 : index
    %c0_2 = arith.constant 0 : index
    %1 = vector.load %arg2[%c0_1, %c0_2] : memref<32x64xbf16, #tpu.memory_space<vmem>>, vector<32x64xbf16>
    %cst = arith.constant dense<0.000000e+00> : vector<16x64xf32>
    %2 = tpu.matmul %0, %1, %cst {dimension_numbers = #tpu.dot_dimension_numbers<[1], [0], [0], [1], [0, 0, 1, 1], [], []>} : vector<16x32xbf16>, vector<32x64xbf16>, vector<16x64xf32> -> vector<16x64xf32>
    %c0_3 = arith.constant 0 : index
    %c0_4 = arith.constant 0 : index
    %3 = vector.load %arg3[%c0_3, %c0_4] : memref<1x64xf32, #tpu.memory_space<vmem>>, vector<1x64xf32>
    %4 = vector.broadcast %3 : vector<1x64xf32> to vector<16x64xf32>
    %5 = arith.addf %2, %4 : vector<16x64xf32>
    %6 = arith.truncf %5 : vector<16x64xf32> to vector<16x64xbf16>
    %7 = arith.mulf %6, %6 : vector<16x64xbf16>
    %8 = arith.mulf %6, %7 : vector<16x64xbf16>
    %cst_5 = arith.constant 4.467770e-02 : bf16
    %9 = vector.broadcast %cst_5 : bf16 to vector<16x64xbf16>
    %10 = arith.mulf %9, %8 : vector<16x64xbf16>
    %11 = arith.addf %6, %10 : vector<16x64xbf16>
    %cst_6 = arith.constant 7.968750e-01 : bf16
    %12 = vector.broadcast %cst_6 : bf16 to vector<16x64xbf16>
    %13 = arith.mulf %12, %11 : vector<16x64xbf16>
    %14 = math.tanh %13 : vector<16x64xbf16>
    %cst_7 = arith.constant 1.000000e+00 : bf16
    %15 = vector.broadcast %cst_7 : bf16 to vector<16x64xbf16>
    %16 = arith.addf %15, %14 : vector<16x64xbf16>
    %cst_8 = arith.constant 5.000000e-01 : bf16
    %17 = vector.broadcast %cst_8 : bf16 to vector<16x64xbf16>
    %18 = arith.mulf %17, %16 : vector<16x64xbf16>
    %19 = arith.mulf %6, %18 : vector<16x64xbf16>
    %c0_9 = arith.constant 0 : index
    %c0_10 = arith.constant 0 : index
    %20 = vector.load %arg4[%c0_9, %c0_10] : memref<64x32xbf16, #tpu.memory_space<vmem>>, vector<64x32xbf16>
    %cst_11 = arith.constant dense<0.000000e+00> : vector<16x32xf32>
    %21 = tpu.matmul %19, %20, %cst_11 {dimension_numbers = #tpu.dot_dimension_numbers<[1], [0], [0], [1], [0, 0, 1, 1], [], []>} : vector<16x64xbf16>, vector<64x32xbf16>, vector<16x32xf32> -> vector<16x32xf32>
    %c0_12 = arith.constant 0 : index
    %c0_13 = arith.constant 0 : index
    %22 = vector.load %arg5[%c0_12, %c0_13] : memref<1x32xf32, #tpu.memory_space<vmem>>, vector<1x32xf32>
    %23 = vector.broadcast %22 : vector<1x32xf32> to vector<16x32xf32>
    %24 = arith.addf %21, %23 : vector<16x32xf32>
    %25 = arith.extf %0 : vector<16x32xbf16> to vector<16x32xf32>
    %26 = arith.addf %24, %25 : vector<16x32xf32>
    %cst_14 = arith.constant dense<0.000000e+00> : vector<16xf32>
    %27 = vector.multi_reduction <add>, %26, %cst_14 [1] : vector<16x32xf32> to vector<16xf32>
    %28 = vector.shape_cast %27 : vector<16xf32> to vector<16x1xf32>
    %cst_15 = arith.constant 3.200000e+01 : f32
    %29 = vector.broadcast %cst_15 : f32 to vector<16x1xf32>
    %30 = arith.divf %28, %29 : vector<16x1xf32>
    %31 = vector.broadcast %30 : vector<16x1xf32> to vector<16x32xf32>
    %32 = arith.subf %26, %31 : vector<16x32xf32>
    %33 = arith.mulf %32, %32 : vector<16x32xf32>
    %cst_16 = arith.constant dense<0.000000e+00> : vector<16xf32>
    %34 = vector.multi_reduction <add>, %33, %cst_16 [1] : vector<16x32xf32> to vector<16xf32>
    %35 = vector.shape_cast %34 : vector<16xf32> to vector<16x1xf32>
    %cst_17 = arith.constant 3.200000e+01 : f32
    %36 = vector.broadcast %cst_17 : f32 to vector<16x1xf32>
    %37 = arith.divf %35, %36 : vector<16x1xf32>
    %cst_18 = arith.constant 9.99999996E-13 : f32
    %38 = vector.broadcast %cst_18 : f32 to vector<16x1xf32>
    %39 = arith.addf %37, %38 : vector<16x1xf32>
    %40 = math.rsqrt %39 : vector<16x1xf32>
    %41 = vector.broadcast %30 : vector<16x1xf32> to vector<16x32xf32>
    %42 = arith.subf %26, %41 : vector<16x32xf32>
    %43 = vector.broadcast %40 : vector<16x1xf32> to vector<16x32xf32>
    %44 = arith.mulf %42, %43 : vector<16x32xf32>
    %c0_19 = arith.constant 0 : index
    %c0_20 = arith.constant 0 : index
    %45 = vector.load %arg6[%c0_19, %c0_20] : memref<1x32xf32, #tpu.memory_space<vmem>>, vector<1x32xf32>
    %46 = vector.broadcast %45 : vector<1x32xf32> to vector<16x32xf32>
    %47 = arith.mulf %44, %46 : vector<16x32xf32>
    %c0_21 = arith.constant 0 : index
    %c0_22 = arith.constant 0 : index
    %48 = vector.load %arg7[%c0_21, %c0_22] : memref<1x32xf32, #tpu.memory_space<vmem>>, vector<1x32xf32>
    %49 = vector.broadcast %48 : vector<1x32xf32> to vector<16x32xf32>
    %50 = arith.addf %47, %49 : vector<16x32xf32>
    %51 = arith.truncf %50 : vector<16x32xf32> to vector<16x32xbf16>
    %c0_23 = arith.constant 0 : index
    %c0_24 = arith.constant 0 : index
    %52 = vector.load %arg8[%c0_23, %c0_24] : memref<16x32xbf16, #tpu.memory_space<vmem>>, vector<16x32xbf16>
    tpu.vector_store %arg8[%c0_23, %c0_24], %51 {strides = array<i32>} : memref<16x32xbf16, #tpu.memory_space<vmem>>, vector<16x32xbf16>,
    return
  }
  func.func @transform_0(%arg0: i32) -> (i32, i32) {
    %c0_i32 = arith.constant 0 : i32
    %c0_i32_0 = arith.constant 0 : i32
    return %arg0, %c0_i32 : i32, i32
  }
  func.func @transform_1(%arg0: i32) -> (i32, i32) {
    %c0_i32 = arith.constant 0 : i32
    %c0_i32_0 = arith.constant 0 : i32
    %c0_i32_1 = arith.constant 0 : i32
    return %c0_i32, %c0_i32_0 : i32, i32
  }
  func.func @transform_2(%arg0: i32) -> (i32, i32) {
    %c0_i32 = arith.constant 0 : i32
    %c0_i32_0 = arith.constant 0 : i32
    %c0_i32_1 = arith.constant 0 : i32
    return %c0_i32, %c0_i32_0 : i32, i32
  }
  func.func @transform_3(%arg0: i32) -> (i32, i32) {
    %c0_i32 = arith.constant 0 : i32
    %c0_i32_0 = arith.constant 0 : i32
    %c0_i32_1 = arith.constant 0 : i32
    return %c0_i32, %c0_i32_0 : i32, i32
  }
  func.func @transform_4(%arg0: i32) -> (i32, i32) {
    %c0_i32 = arith.constant 0 : i32
    %c0_i32_0 = arith.constant 0 : i32
    %c0_i32_1 = arith.constant 0 : i32
    return %c0_i32, %c0_i32_0 : i32, i32
  }
  func.func @transform_5(%arg0: i32) -> (i32, i32) {
    %c0_i32 = arith.constant 0 : i32
    %c0_i32_0 = arith.constant 0 : i32
    %c0_i32_1 = arith.constant 0 : i32
    return %c0_i32, %c0_i32_0 : i32, i32
  }
  func.func @transform_6(%arg0: i32) -> (i32, i32) {
    %c0_i32 = arith.constant 0 : i32
    %c0_i32_0 = arith.constant 0 : i32
    %c0_i32_1 = arith.constant 0 : i32
    return %c0_i32, %c0_i32_0 : i32, i32
  }
  func.func @transform_7(%arg0: i32) -> (i32, i32) {
    %c0_i32 = arith.constant 0 : i32
    %c0_i32_0 = arith.constant 0 : i32
    return %arg0, %c0_i32 : i32, i32
  }
}

module attributes {stable_mosaic.version = 11 : i64} {
  func.func @_head_kernel(%arg0: memref<2x32xbf16, #tpu.memory_space<vmem>>, %arg1: memref<32x32xbf16, #tpu.memory_space<vmem>>, %arg2: memref<1x32xf32, #tpu.memory_space<vmem>>, %arg3: memref<32x16xbf16, #tpu.memory_space<vmem>>, %arg4: memref<1x16xf32, #tpu.memory_space<vmem>>, %arg5: memref<2x16xf32, #tpu.memory_space<vmem>>) attributes {dimension_semantics = [], scalar_prefetch = 0 : i64, scratch_operands = 0 : i64, tpu.core_type = #tpu.core_type<tc>} {
    %c0 = arith.constant 0 : index
    %c0_0 = arith.constant 0 : index
    %0 = vector.load %arg0[%c0, %c0_0] : memref<2x32xbf16, #tpu.memory_space<vmem>>, vector<2x32xbf16>
    %c0_1 = arith.constant 0 : index
    %c0_2 = arith.constant 0 : index
    %1 = vector.load %arg1[%c0_1, %c0_2] : memref<32x32xbf16, #tpu.memory_space<vmem>>, vector<32x32xbf16>
    %cst = arith.constant dense<0.000000e+00> : vector<2x32xf32>
    %2 = tpu.matmul %0, %1, %cst {dimension_numbers = #tpu.dot_dimension_numbers<[1], [0], [0], [1], [0, 0, 1, 1], [], []>} : vector<2x32xbf16>, vector<32x32xbf16>, vector<2x32xf32> -> vector<2x32xf32>
    %c0_3 = arith.constant 0 : index
    %c0_4 = arith.constant 0 : index
    %3 = vector.load %arg2[%c0_3, %c0_4] : memref<1x32xf32, #tpu.memory_space<vmem>>, vector<1x32xf32>
    %4 = vector.broadcast %3 : vector<1x32xf32> to vector<2x32xf32>
    %5 = arith.addf %2, %4 : vector<2x32xf32>
    %6 = math.tanh %5 : vector<2x32xf32>
    %7 = arith.truncf %6 : vector<2x32xf32> to vector<2x32xbf16>
    %c0_5 = arith.constant 0 : index
    %c0_6 = arith.constant 0 : index
    %8 = vector.load %arg3[%c0_5, %c0_6] : memref<32x16xbf16, #tpu.memory_space<vmem>>, vector<32x16xbf16>
    %cst_7 = arith.constant dense<0.000000e+00> : vector<2x16xf32>
    %9 = tpu.matmul %7, %8, %cst_7 {dimension_numbers = #tpu.dot_dimension_numbers<[1], [0], [0], [1], [0, 0, 1, 1], [], []>} : vector<2x32xbf16>, vector<32x16xbf16>, vector<2x16xf32> -> vector<2x16xf32>
    %c0_8 = arith.constant 0 : index
    %c0_9 = arith.constant 0 : index
    %10 = vector.load %arg4[%c0_8, %c0_9] : memref<1x16xf32, #tpu.memory_space<vmem>>, vector<1x16xf32>
    %11 = vector.broadcast %10 : vector<1x16xf32> to vector<2x16xf32>
    %12 = arith.addf %9, %11 : vector<2x16xf32>
    %cst_10 = arith.constant 0.000000e+00 : f32
    %13 = vector.broadcast %cst_10 : f32 to vector<2x16xf32>
    %14 = arith.maximumf %12, %13 : vector<2x16xf32>
    %c0_11 = arith.constant 0 : index
    %c0_12 = arith.constant 0 : index
    %15 = vector.load %arg5[%c0_11, %c0_12] : memref<2x16xf32, #tpu.memory_space<vmem>>, vector<2x16xf32>
    tpu.vector_store %arg5[%c0_11, %c0_12], %14 {strides = array<i32>} : memref<2x16xf32, #tpu.memory_space<vmem>>, vector<2x16xf32>,
    return
  }
}

</mosaic_0001>

<llo_original>
// kernel: text_encoder_forward.6
$region0: #{text_encoder_forward.6}
  #allocation0 [shape = 'u32[]', space=smem, size = 0x4, offset = 0x4, fixed_abs, tag = 'smem constant byte address 0x4 - core index']
  #allocation1 [shape = 'u32[144,128]{1,0:T(1,128)}', space=vmem, size = 0x12000, scoped, tag = 'internal scratch']
  %s0 = inlined_call_operand.vmem [shape: f32[16,32], index: 0, kind: input, shape index: {}]
  %s1 = inlined_call_operand.vmem [shape: f32[1,32], index: 1, kind: input, shape index: {}]
  %s2 = inlined_call_operand.vmem [shape: f32[1,32], index: 2, kind: input, shape index: {}]
  %s3 = inlined_call_operand.vmem [shape: bf16[16,32], index: 3, kind: output, shape index: {}]
  %s4 = sld [smem:[#allocation0]]
  $region22: #{text_encoder_forward.6} parent=0
    _
  %s6 = ssub.s32 1, %s4
  %s7 = scalar_select 0, %s6, %s4
  // Predicated region
  $region2: #{text_encoder_forward.6} parent=0 // pred_check
    _
  $region3: #{text_encoder_forward.6} parent=0 // pred_check_branch
    %9 = sbr.rel (0) target = $region5
  $region4: #{text_encoder_forward.6} parent=0 // pred_region
    _
  $region5: #{text_encoder_forward.6} parent=0 // pred_fallthru
    _
  // Predicated region
  $region6: #{text_encoder_forward.6} parent=0 // pred_check
    _
  $region7: #{text_encoder_forward.6} parent=0 // pred_check_branch
    %11 = sbr.rel (0) target = $region9
  $region8: #{text_encoder_forward.6} parent=0 // pred_region
    _
  $region9: #{text_encoder_forward.6} parent=0 // pred_fallthru
    _
  // Predicated region
  $region10: #{text_encoder_forward.6} parent=0 // pred_check
    _
  $region11: #{text_encoder_forward.6} parent=0 // pred_check_branch
    %13 = sbr.rel (0) target = $region13
  $region12: #{text_encoder_forward.6} parent=0 // pred_region
    _
  $region13: #{text_encoder_forward.6} parent=0 // pred_fallthru
    _
  %v14 = vld [vmem:[%s0] sm:$0xff]
  %v15 = vld [vmem:[%s0 + $0x8] sm:$0xff]
  %vm16 = vcmask 261120
  %v17 = vsel %vm16, %v14, 0.0
  %18 = vadd.xlane.f32.xlu0 %v17
  %v19 = vpop.xlane.xlu0 %18
  %v20 = vsel %vm16, %v15, 0.0
  %21 = vadd.xlane.f32.xlu0 %v20
  %v22 = vpop.xlane.xlu0 %21
  %v23 = vrcp.pop 32.0
  %v24 = vmul.f32 %v19, %v23
  %v25 = vmul.f32 %v22, %v23
  %v26 = vsub.f32 %v14, %v24
  %v27 = vsub.f32 %v15, %v25
  %v28 = vmul.f32 %v26, %v26
  %v29 = vmul.f32 %v27, %v27
  %v30 = vsel %vm16, %v28, 0.0
  %31 = vadd.xlane.f32.xlu0 %v30
  %v32 = vpop.xlane.xlu0 %31
  %v33 = vsel %vm16, %v29, 0.0
  %34 = vadd.xlane.f32.xlu0 %v33
  %v35 = vpop.xlane.xlu0 %34
  %v36 = vmul.f32 %v32, %v23
  %v37 = vmul.f32 %v35, %v23
  %v38 = vadd.f32 %v36, 1e-12
  %v39 = vadd.f32 %v37, 1e-12
  %v40 = vrsqrt.pop %v38
  %v41 = vrsqrt.pop %v39
  %v42 = vmul.f32 %v26, %v40
  %v43 = vmul.f32 %v27, %v41
  %v44 = vld [vmem:[%s1] sm:$0x1]
  %v46 = vlaneseq
  %v47 = vshrl.u32 %v46, 7
  %v48 = vsub.s32 0, %v47
  %v49 = vrot.slane %v44, %v48
  %v51 = vmul.f32 %v42, %v49
  %v52 = vmul.f32 %v43, %v49
  %v53 = vld [vmem:[%s2] sm:$0x1]
  %v55 = vlaneseq
  %v56 = vshrl.u32 %v55, 7
  %v57 = vsub.s32 0, %v56
  %v58 = vrot.slane %v53, %v57
  %v60 = vadd.f32 %v51, %v58
  %v61 = vadd.f32 %v52, %v58
  %v62 = vpack.c.bf16 %v61, %v60
  %v64 = vunpack.c.l.b16 %v62
  %v65 = vunpack.c.h.b16 %v62
  %v66 = vpack.c.b16 %v64, %v64
  %v67 = vpack.c.b16 %v65, %v65
  %vm70 = vcmask 257024
  %71 = vst.msk [vmem:[%s3] sm:$0xf] %vm70, %v66
  %72 = vst.msk [vmem:[%s3 + $0x4] sm:$0xf] %vm70, %v67
  // Predicated region
  $region14: #{text_encoder_forward.6} parent=0 // pred_check
    _
  $region15: #{text_encoder_forward.6} parent=0 // pred_check_branch
    %74 = sbr.rel (0) target = $region17
  $region16: #{text_encoder_forward.6} parent=0 // pred_region
    _
  $region17: #{text_encoder_forward.6} parent=0 // pred_fallthru
    _
  // Predicated region
  $region18: #{text_encoder_forward.6} parent=0 // pred_check
    _
  $region19: #{text_encoder_forward.6} parent=0 // pred_check_branch
    %76 = sbr.rel (0) target = $region21
  $region20: #{text_encoder_forward.6} parent=0 // pred_region
    _
  $region21: #{text_encoder_forward.6} parent=0 // pred_fallthru
    _

// kernel: text_encoder_forward.11
$region0: #{text_encoder_forward.11}
  #allocation0 [shape = 'u32[]', space=smem, size = 0x4, offset = 0x4, fixed_abs, tag = 'smem constant byte address 0x4 - core index']
  #allocation1 [shape = 'u32[144,128]{1,0:T(1,128)}', space=vmem, size = 0x12000, scoped, tag = 'internal scratch']
  %s0 = inlined_call_operand.vmem [shape: bf16[2,32], index: 0, kind: input, shape index: {}]
  %s1 = inlined_call_operand.vmem [shape: bf16[32,32], index: 1, kind: input, shape index: {}]
  %s2 = inlined_call_operand.vmem [shape: f32[1,32], index: 2, kind: input, shape index: {}]
  %s3 = inlined_call_operand.vmem [shape: bf16[32,16], index: 3, kind: input, shape index: {}]
  %s4 = inlined_call_operand.vmem [shape: f32[1,16], index: 4, kind: input, shape index: {}]
  %s5 = inlined_call_operand.hbm [shape: f32[2,16], index: 5, kind: output, shape index: {}]
  %s6 = sld [smem:[#allocation0]]
  $region30: #{text_encoder_forward.11} parent=0
    _
  %s8 = ssub.s32 1, %s6
  %s9 = scalar_select 0, %s8, %s6
  $region1: #{text_encoder_forward.11} parent=0
    #allocation2 [shape = 'u8[1024]{0}', space=vmem, size = 0x400, scoped, tag = 'output window, operand 0, single buffered']
    #allocation3 [shape = 's32[1]{0}', space=sflag, size = 0x4, scoped, tag = 'scoped memory for text_encoder_forward.11']
    %10 = vsyncpa [#allocation3], 0
    // Predicated region
    $region2: #{text_encoder_forward.11} parent=1 // pred_check
      _
    $region3: #{text_encoder_forward.11} parent=1 // pred_check_branch
      %12 = sbr.rel (0) target = $region5
    $region4: #{text_encoder_forward.11} parent=1 // pred_region
      _
    $region5: #{text_encoder_forward.11} parent=1 // pred_fallthru
      _
    // Predicated region
    $region6: #{text_encoder_forward.11} parent=1 // pred_check
      _
    $region7: #{text_encoder_forward.11} parent=1 // pred_check_branch
      %14 = sbr.rel (0) target = $region9
    $region8: #{text_encoder_forward.11} parent=1 // pred_region
      _
    $region9: #{text_encoder_forward.11} parent=1 // pred_fallthru
      _
    // Predicated region
    $region10: #{text_encoder_forward.11} parent=1 // pred_check
      _
    $region11: #{text_encoder_forward.11} parent=1 // pred_check_branch
      %16 = sbr.rel (0) target = $region13
    $region12: #{text_encoder_forward.11} parent=1 // pred_region
      _
    $region13: #{text_encoder_forward.11} parent=1 // pred_fallthru
      _
    // Predicated region
    $region14: #{text_encoder_forward.11} parent=1 // pred_check
      _
    $region15: #{text_encoder_forward.11} parent=1 // pred_check_branch
      %18 = sbr.rel (0) target = $region17
    $region16: #{text_encoder_forward.11} parent=1 // pred_region
      _
    $region17: #{text_encoder_forward.11} parent=1 // pred_fallthru
      _
    // Predicated region
    $region18: #{text_encoder_forward.11} parent=1 // pred_check
      _
    $region19: #{text_encoder_forward.11} parent=1 // pred_check_branch
      %20 = sbr.rel (0) target = $region21
    $region20: #{text_encoder_forward.11} parent=1 // pred_region
      _
    $region21: #{text_encoder_forward.11} parent=1 // pred_fallthru
      _
    %v22 = vld [vmem:[%s0] sm:$0x1]
    %v23 = vld [vmem:[%s1] sm:$0xf]
    %v24 = vld [vmem:[%s1 + $0x4] sm:$0xf]
    %v25 = vld [vmem:[%s1 + $0x8] sm:$0xf]
    %v26 = vld [vmem:[%s1 + $0xc] sm:$0xf]
    %v27 = vld [vmem:[%s2] sm:$0x1]
    %v29 = vlaneseq
    %v30 = vshrl.u32 %v29, 7
    %v31 = vsub.s32 0, %v30
    %v32 = vrot.slane %v27, %v31
    %v38 = vunpack.c.l.b16 %v23
    %v39 = vunpack.c.l.b16 %v24
    %v40 = vunpack.c.l.b16 %v25
    %v41 = vunpack.c.l.b16 %v26
    %v42 = vpack.c.b16 %v39, %v38
    %v43 = vpack.c.b16 %v41, %v40
    %vm46 = vcmask 261120
    %v48 = vsel %vm46, %v22, 0
    %50 = vmatprep.subr.bf16.mxu0 0
    %51 = vmatpush1.bf16.msra.mxu0 0
    %52 = vmatprep.subr.bf16.mxu0 0
    %53 = vmatpush1.bf16.msra.mxu0 0
    %54 = vmatprep.subr.bf16.mxu0 0
    %55 = vmatpush1.bf16.msra.mxu0 0
    %56 = vmatprep.subr.bf16.mxu0 0
    %57 = vmatpush1.bf16.msra.mxu0 0
    %58 = vmatprep.subr.bf16.mxu0 0
    %59 = vmatpush1.bf16.msra.mxu0 0
    %60 = vmatprep.subr.bf16.mxu0 0
    %61 = vmatpush1.bf16.msra.mxu0 0
    %62 = vmatprep.subr.bf16.mxu0 0
    %63 = vmatpush1.bf16.msra.mxu0 %v43
    %64 = vmatprep.subr.bf16.mxu0 0
    %65 = vmatpush1.bf16.msra.mxu0 %v42
    %66 = vmatprep.subr.bf16.mxu0 0
    %67 = vmatpush2.bf16.msra.mxu0 0
    %68 = vmatprep.subr.bf16.mxu0 0
    %69 = vmatpush2.bf16.msra.mxu0 0
    %70 = vmatprep.subr.bf16.mxu0 0
    %71 = vmatpush2.bf16.msra.mxu0 0
    %72 = vmatprep.subr.bf16.mxu0 0
    %73 = vmatpush2.bf16.msra.mxu0 0
    %74 = vmatprep.subr.bf16.mxu0 0
    %75 = vmatpush2.bf16.msra.mxu0 0
    %76 = vmatprep.subr.bf16.mxu0 0
    %77 = vmatpush2.bf16.msra.mxu0 0
    %78 = vmatprep.subr.bf16.mxu0 0
    %79 = vmatpush2.bf16.msra.mxu0 0
    %80 = vmatprep.subr.bf16.mxu0 0
    %81 = vmatpush2.bf16.msra.mxu0 0
    %82 = vmatprep.mubr.bf16.mxu0 0
    %83 = vmatmul.mubr.bf16.gmra.mxu0 %v48
    %v84 = vpop.f32.mrf.mxu0
    %v85 = vadd.f32 %v32, %v84
    %v86 = vpop.f32.mrf.mxu0
    %v87 = vpop.f32.mrf.mxu0
    %v88 = vpop.f32.mrf.mxu0
    %89 = vdwg.mxu0
    %v90 = vtanh.pop %v85
    %v91 = vpack.c.bf16 %v90, %v90
    %v92 = vld [vmem:[%s3] sm:$0xf]
    %v93 = vld [vmem:[%s3 + $0x4] sm:$0xf]
    %v94 = vld [vmem:[%s3 + $0x8] sm:$0xf]
    %v95 = vld [vmem:[%s3 + $0xc] sm:$0xf]
    %v96 = vld [vmem:[%s4] sm:$0x1]
    %v98 = vlaneseq
    %v99 = vshrl.u32 %v98, 7
    %v100 = vsub.s32 0, %v99
    %v101 = vrot.slane %v96, %v100
    %v107 = vunpack.c.l.b16 %v92
    %v108 = vunpack.c.l.b16 %v93
    %v109 = vunpack.c.l.b16 %v94
    %v110 = vunpack.c.l.b16 %v95
    %v111 = vpack.c.b16 %v108, %v107
    %v112 = vpack.c.b16 %v110, %v109
    %v116 = vsel %vm46, %v91, 0
    %118 = vmatprep.subr.bf16.mxu0 0
    %119 = vmatpush1.bf16.msra.mxu0 0
    %120 = vmatprep.subr.bf16.mxu0 0
    %121 = vmatpush1.bf16.msra.mxu0 0
    %122 = vmatprep.subr.bf16.mxu0 0
    %123 = vmatpush1.bf16.msra.mxu0 0
    %124 = vmatprep.subr.bf16.mxu0 0
    %125 = vmatpush1.bf16.msra.mxu0 0
    %126 = vmatprep.subr.bf16.mxu0 0
    %127 = vmatpush1.bf16.msra.mxu0 0
    %128 = vmatprep.subr.bf16.mxu0 0
    %129 = vmatpush1.bf16.msra.mxu0 0
    %130 = vmatprep.subr.bf16.mxu0 0
    %131 = vmatpush1.bf16.msra.mxu0 %v112
    %132 = vmatprep.subr.bf16.mxu0 0
    %133 = vmatpush1.bf16.msra.mxu0 %v111
    %134 = vmatprep.subr.bf16.mxu0 0
    %135 = vmatpush2.bf16.msra.mxu0 0
    %136 = vmatprep.subr.bf16.mxu0 0
    %137 = vmatpush2.bf16.msra.mxu0 0
    %138 = vmatprep.subr.bf16.mxu0 0
    %139 = vmatpush2.bf16.msra.mxu0 0
    %140 = vmatprep.subr.bf16.mxu0 0
    %141 = vmatpush2.bf16.msra.mxu0 0
    %142 = vmatprep.subr.bf16.mxu0 0
    %143 = vmatpush2.bf16.msra.mxu0 0
    %144 = vmatprep.subr.bf16.mxu0 0
    %145 = vmatpush2.bf16.msra.mxu0 0
    %146 = vmatprep.subr.bf16.mxu0 0
    %147 = vmatpush2.bf16.msra.mxu0 0
    %148 = vmatprep.subr.bf16.mxu0 0
    %149 = vmatpush2.bf16.msra.mxu0 0
    %150 = vmatprep.mubr.bf16.mxu0 0
    %151 = vmatmul.mubr.bf16.gmra.mxu0 %v116
    %v152 = vpop.f32.mrf.mxu0
    %v153 = vadd.f32 %v101, %v152
    %v154 = vpop.f32.mrf.mxu0
    %v155 = vpop.f32.mrf.mxu0
    %v156 = vpop.f32.mrf.mxu0
    %157 = vdwg.mxu0
    %v158 = vmax.f32 %v153, 0.0
    %vm159 = vcmask 123904
    %160 = vst.msk [vmem:[#allocation2] sm:$0x3] %vm159, %v158
    // Predicated region
    $region22: #{text_encoder_forward.11} parent=1 // pred_check
      _
    $region23: #{text_encoder_forward.11} parent=1 // pred_check_branch
      %162 = sbr.rel (0) target = $region25
    $region24: #{text_encoder_forward.11} parent=1 // pred_region
      %s164 = ssub.s32 32, 32
      %165 = vsyncadd [#allocation3], %s164
      %s167 = sshll.u32 [#allocation2], 4
      %s168 = int_to_ptr.vmem [resolvable:$true] %s167
      %170 = dma.vmem_to_hbm [thread:$0]  %s168, 32, %s5, [#allocation3]
    $region25: #{text_encoder_forward.11} parent=1 // pred_fallthru
      _
    // Predicated region
    $region26: #{text_encoder_forward.11} parent=1 // pred_check
      _
    $region27: #{text_encoder_forward.11} parent=1 // pred_check_branch
      %172 = sbr.rel (0) target = $region29
    $region28: #{text_encoder_forward.11} parent=1 // pred_region
      %173 = dma.done [#allocation3], 32
    $region29: #{text_encoder_forward.11} parent=1 // pred_fallthru
      _
    %174 = vsyncpa [#allocation3], 1

// kernel: text_encoder_forward.8
$region0: #{text_encoder_forward.8}
  #allocation0 [shape = 'u32[]', space=smem, size = 0x4, offset = 0x4, fixed_abs, tag = 'smem constant byte address 0x4 - core index']
  #allocation1 [shape = 'u32[144,128]{1,0:T(1,128)}', space=vmem, size = 0x12000, scoped, tag = 'internal scratch']
  %s0 = inlined_call_operand.vmem [shape: bf16[16,32], index: 0, kind: input, shape index: {}, may-alias: {0,7}]
  %s1 = inlined_call_operand.vmem [shape: bf16[32,64], index: 1, kind: input, shape index: {}]
  %s2 = inlined_call_operand.vmem [shape: f32[1,64], index: 2, kind: input, shape index: {}]
  %s3 = inlined_call_operand.vmem [shape: bf16[64,32], index: 3, kind: input, shape index: {}]
  %s4 = inlined_call_operand.vmem [shape: f32[1,32], index: 4, kind: input, shape index: {}]
  %s5 = inlined_call_operand.vmem [shape: f32[1,32], index: 5, kind: input, shape index: {}]
  %s6 = inlined_call_operand.vmem [shape: f32[1,32], index: 6, kind: input, shape index: {}]
  %s7 = inlined_call_operand.vmem [shape: bf16[16,32], index: 7, kind: output, shape index: {}, may-alias: {0,7}]
  %s8 = sld [smem:[#allocation0]]
  $region38: #{text_encoder_forward.8} parent=0
    _
  %s10 = ssub.s32 1, %s8
  %s11 = scalar_select 0, %s10, %s8
  // Predicated region
  $region2: #{text_encoder_forward.8} parent=0 // pred_check
    _
  $region3: #{text_encoder_forward.8} parent=0 // pred_check_branch
    %13 = sbr.rel (0) target = $region5
  $region4: #{text_encoder_forward.8} parent=0 // pred_region
    _
  $region5: #{text_encoder_forward.8} parent=0 // pred_fallthru
    _
  // Predicated region
  $region6: #{text_encoder_forward.8} parent=0 // pred_check
    _
  $region7: #{text_encoder_forward.8} parent=0 // pred_check_branch
    %15 = sbr.rel (0) target = $region9
  $region8: #{text_encoder_forward.8} parent=0 // pred_region
    _
  $region9: #{text_encoder_forward.8} parent=0 // pred_fallthru
    _
  // Predicated region
  $region10: #{text_encoder_forward.8} parent=0 // pred_check
    _
  $region11: #{text_encoder_forward.8} parent=0 // pred_check_branch
    %17 = sbr.rel (0) target = $region13
  $region12: #{text_encoder_forward.8} parent=0 // pred_region
    _
  $region13: #{text_encoder_forward.8} parent=0 // pred_fallthru
    _
  // Predicated region
  $region14: #{text_encoder_forward.8} parent=0 // pred_check
    _
  $region15: #{text_encoder_forward.8} parent=0 // pred_check_branch
    %19 = sbr.rel (0) target = $region17
  $region16: #{text_encoder_forward.8} parent=0 // pred_region
    _
  $region17: #{text_encoder_forward.8} parent=0 // pred_fallthru
    _
  // Predicated region
  $region18: #{text_encoder_forward.8} parent=0 // pred_check
    _
  $region19: #{text_encoder_forward.8} parent=0 // pred_check_branch
    %21 = sbr.rel (0) target = $region21
  $region20: #{text_encoder_forward.8} parent=0 // pred_region
    _
  $region21: #{text_encoder_forward.8} parent=0 // pred_fallthru
    _
  // Predicated region
  $region22: #{text_encoder_forward.8} parent=0 // pred_check
    _
  $region23: #{text_encoder_forward.8} parent=0 // pred_check_branch
    %23 = sbr.rel (0) target = $region25
  $region24: #{text_encoder_forward.8} parent=0 // pred_region
    _
  $region25: #{text_encoder_forward.8} parent=0 // pred_fallthru
    _
  // Predicated region
  $region26: #{text_encoder_forward.8} parent=0 // pred_check
    _
  $region27: #{text_encoder_forward.8} parent=0 // pred_check_branch
    %25 = sbr.rel (0) target = $region29
  $region28: #{text_encoder_forward.8} parent=0 // pred_region
    _
  $region29: #{text_encoder_forward.8} parent=0 // pred_fallthru
    _
  %v31 = vld [vmem:[%s0] sm:$0xf]
  %v32 = vld [vmem:[%s0 + $0x4] sm:$0xf]
  %v33 = vld [vmem:[%s1] sm:$0xf]
  %v34 = vld [vmem:[%s1 + $0x4] sm:$0xf]
  %v35 = vld [vmem:[%s1 + $0x8] sm:$0xf]
  %v36 = vld [vmem:[%s1 + $0xc] sm:$0xf]
  %v37 = vld [vmem:[%s2] sm:$0x1]
  %v39 = vlaneseq
  %v40 = vshrl.u32 %v39, 7
  %v41 = vsub.s32 0, %v40
  %v42 = vrot.slane %v37, %v41
  %v46 = vunpack.c.l.b16 %v31
  %v47 = vunpack.c.l.b16 %v32
  %v48 = vpack.c.b16 %v47, %v46
  %v53 = vunpack.c.l.b16 %v33
  %v54 = vunpack.c.l.b16 %v34
  %v55 = vunpack.c.l.b16 %v35
  %v56 = vunpack.c.l.b16 %v36
  %v57 = vpack.c.b16 %v54, %v53
  %v58 = vpack.c.b16 %v56, %v55
  %vm61 = vcmask 261120
  %v63 = vsel %vm61, %v48, 0
  %65 = vmatprep.subr.bf16.mxu0 0
  %66 = vmatpush1.bf16.msra.mxu0 0
  %67 = vmatprep.subr.bf16.mxu0 0
  %68 = vmatpush1.bf16.msra.mxu0 0
  %69 = vmatprep.subr.bf16.mxu0 0
  %70 = vmatpush1.bf16.msra.mxu0 0
  %71 = vmatprep.subr.bf16.mxu0 0
  %72 = vmatpush1.bf16.msra.mxu0 0
  %73 = vmatprep.subr.bf16.mxu0 0
  %74 = vmatpush1.bf16.msra.mxu0 0
  %75 = vmatprep.subr.bf16.mxu0 0
  %76 = vmatpush1.bf16.msra.mxu0 0
  %77 = vmatprep.subr.bf16.mxu0 0
  %78 = vmatpush1.bf16.msra.mxu0 %v58
  %79 = vmatprep.subr.bf16.mxu0 0
  %80 = vmatpush1.bf16.msra.mxu0 %v57
  %81 = vmatprep.subr.bf16.mxu0 0
  %82 = vmatpush2.bf16.msra.mxu0 0
  %83 = vmatprep.subr.bf16.mxu0 0
  %84 = vmatpush2.bf16.msra.mxu0 0
  %85 = vmatprep.subr.bf16.mxu0 0
  %86 = vmatpush2.bf16.msra.mxu0 0
  %87 = vmatprep.subr.bf16.mxu0 0
  %88 = vmatpush2.bf16.msra.mxu0 0
  %89 = vmatprep.subr.bf16.mxu0 0
  %90 = vmatpush2.bf16.msra.mxu0 0
  %91 = vmatprep.subr.bf16.mxu0 0
  %92 = vmatpush2.bf16.msra.mxu0 0
  %93 = vmatprep.subr.bf16.mxu0 0
  %94 = vmatpush2.bf16.msra.mxu0 0
  %95 = vmatprep.subr.bf16.mxu0 0
  %96 = vmatpush2.bf16.msra.mxu0 0
  %97 = vmatprep.mubr.bf16.mxu0 0
  %98 = vmatmul.mubr.bf16.gmra.mxu0 %v63
  %v99 = vpop.f32.mrf.mxu0
  %v100 = vadd.f32 %v42, %v99
  %v101 = vpop.f32.mrf.mxu0
  %v102 = vpop.f32.mrf.mxu0
  %v103 = vadd.f32 %v42, %v102
  %v104 = vpop.f32.mrf.mxu0
  %105 = vdwg.mxu0
  %v106 = vpack.c.bf16 %v103, %v100
  %v107 = vmul.bf16 %v106, %v106
  %v108 = vmul.bf16 %v106, %v107
  %v109 = vmul.bf16 %v108, 1027030327
  %v110 = vadd.bf16 %v106, %v109
  %v111 = vmul.bf16 %v110, 1061961548
  %v112 = vtanh.bf16.pop %v111
  %v113 = vadd.bf16 %v112, 1065369472
  %v114 = vmul.bf16 %v113, 1056980736
  %v115 = vmul.bf16 %v106, %v114
  %v116 = vld [vmem:[%s3] sm:$0xf]
  %v117 = vld [vmem:[%s3 + $0x4] sm:$0xf]
  %v118 = vld [vmem:[%s3 + $0x8] sm:$0xf]
  %v119 = vld [vmem:[%s3 + $0xc] sm:$0xf]
  %v120 = vld [vmem:[%s3 + $0x10] sm:$0xf]
  %v121 = vld [vmem:[%s3 + $0x14] sm:$0xf]
  %v122 = vld [vmem:[%s3 + $0x18] sm:$0xf]
  %v123 = vld [vmem:[%s3 + $0x1c] sm:$0xf]
  %v124 = vld [vmem:[%s4] sm:$0x1]
  %v126 = vlaneseq
  %v127 = vshrl.u32 %v126, 7
  %v128 = vsub.s32 0, %v127
  %v129 = vrot.slane %v124, %v128
  %v139 = vunpack.c.l.b16 %v116
  %v140 = vunpack.c.l.b16 %v117
  %v141 = vunpack.c.l.b16 %v118
  %v142 = vunpack.c.l.b16 %v119
  %v143 = vunpack.c.l.b16 %v120
  %v144 = vunpack.c.l.b16 %v121
  %v145 = vunpack.c.l.b16 %v122
  %v146 = vunpack.c.l.b16 %v123
  %v147 = vpack.c.b16 %v140, %v139
  %v148 = vpack.c.b16 %v142, %v141
  %v149 = vpack.c.b16 %v144, %v143
  %v150 = vpack.c.b16 %v146, %v145
  %vm155 = vcmask 523264
  %v157 = vsel %vm155, %v115, 0
  %159 = vmatprep.subr.bf16.mxu0 0
  %160 = vmatpush1.bf16.msra.mxu0 0
  %161 = vmatprep.subr.bf16.mxu0 0
  %162 = vmatpush1.bf16.msra.mxu0 0
  %163 = vmatprep.subr.bf16.mxu0 0
  %164 = vmatpush1.bf16.msra.mxu0 0
  %165 = vmatprep.subr.bf16.mxu0 0
  %166 = vmatpush1.bf16.msra.mxu0 0
  %167 = vmatprep.subr.bf16.mxu0 0
  %168 = vmatpush1.bf16.msra.mxu0 %v150
  %169 = vmatprep.subr.bf16.mxu0 0
  %170 = vmatpush1.bf16.msra.mxu0 %v149
  %171 = vmatprep.subr.bf16.mxu0 0
  %172 = vmatpush1.bf16.msra.mxu0 %v148
  %173 = vmatprep.subr.bf16.mxu0 0
  %174 = vmatpush1.bf16.msra.mxu0 %v147
  %175 = vmatprep.subr.bf16.mxu0 0
  %176 = vmatpush2.bf16.msra.mxu0 0
  %177 = vmatprep.subr.bf16.mxu0 0
  %178 = vmatpush2.bf16.msra.mxu0 0
  %179 = vmatprep.subr.bf16.mxu0 0
  %180 = vmatpush2.bf16.msra.mxu0 0
  %181 = vmatprep.subr.bf16.mxu0 0
  %182 = vmatpush2.bf16.msra.mxu0 0
  %183 = vmatprep.subr.bf16.mxu0 0
  %184 = vmatpush2.bf16.msra.mxu0 0
  %185 = vmatprep.subr.bf16.mxu0 0
  %186 = vmatpush2.bf16.msra.mxu0 0
  %187 = vmatprep.subr.bf16.mxu0 0
  %188 = vmatpush2.bf16.msra.mxu0 0
  %189 = vmatprep.subr.bf16.mxu0 0
  %190 = vmatpush2.bf16.msra.mxu0 0
  %191 = vmatprep.mubr.bf16.mxu0 0
  %192 = vmatmul.mubr.bf16.gmra.mxu0 %v157
  %v193 = vpop.f32.mrf.mxu0
  %v194 = vadd.f32 %v129, %v193
  %v195 = vpop.f32.mrf.mxu0
  %v196 = vpop.f32.mrf.mxu0
  %v197 = vadd.f32 %v129, %v196
  %v198 = vpop.f32.mrf.mxu0
  %199 = vdwg.mxu0
  %v200 = vunpack.c.l.bf16 %v31
  %v201 = vunpack.c.l.bf16 %v32
  %v202 = vadd.f32 %v194, %v200
  %v203 = vadd.f32 %v197, %v201
  %v204 = vsel %vm61, %v202, 0.0
  %205 = vadd.xlane.f32.xlu0 %v204
  %v206 = vpop.xlane.xlu0 %205
  %v207 = vsel %vm61, %v203, 0.0
  %208 = vadd.xlane.f32.xlu0 %v207
  %v209 = vpop.xlane.xlu0 %208
  %v210 = vrcp.pop 32.0
  %v211 = vmul.f32 %v206, %v210
  %v212 = vmul.f32 %v209, %v210
  %v213 = vsub.f32 %v202, %v211
  %v214 = vsub.f32 %v203, %v212
  %v215 = vmul.f32 %v213, %v213
  %v216 = vmul.f32 %v214, %v214
  %v217 = vsel %vm61, %v215, 0.0
  %218 = vadd.xlane.f32.xlu0 %v217
  %v219 = vpop.xlane.xlu0 %218
  %v220 = vsel %vm61, %v216, 0.0
  %221 = vadd.xlane.f32.xlu0 %v220
  %v222 = vpop.xlane.xlu0 %221
  %v223 = vmul.f32 %v219, %v210
  %v224 = vmul.f32 %v222, %v210
  %v225 = vadd.f32 %v223, 1e-12
  %v226 = vadd.f32 %v224, 1e-12
  %v227 = vrsqrt.pop %v225
  %v228 = vrsqrt.pop %v226
  %v229 = vmul.f32 %v213, %v227
  %v230 = vmul.f32 %v214, %v228
  %v231 = vld [vmem:[%s5] sm:$0x1]
  %v233 = vlaneseq
  %v234 = vshrl.u32 %v233, 7
  %v235 = vsub.s32 0, %v234
  %v236 = vrot.slane %v231, %v235
  %v238 = vmul.f32 %v229, %v236
  %v239 = vmul.f32 %v230, %v236
  %v240 = vld [vmem:[%s6] sm:$0x1]
  %v242 = vlaneseq
  %v243 = vshrl.u32 %v242, 7
  %v244 = vsub.s32 0, %v243
  %v245 = vrot.slane %v240, %v244
  %v247 = vadd.f32 %v238, %v245
  %v248 = vadd.f32 %v239, %v245
  %v249 = vpack.c.bf16 %v248, %v247
  %v251 = vunpack.c.l.b16 %v249
  %v252 = vunpack.c.h.b16 %v249
  %v253 = vpack.c.b16 %v251, %v251
  %v254 = vpack.c.b16 %v252, %v252
  %vm257 = vcmask 257024
  %258 = vst.msk [vmem:[%s7] sm:$0xf] %vm257, %v253
  %259 = vst.msk [vmem:[%s7 + $0x4] sm:$0xf] %vm257, %v254
  // Predicated region
  $region30: #{text_encoder_forward.8} parent=0 // pred_check
    _
  $region31: #{text_encoder_forward.8} parent=0 // pred_check_branch
    %261 = sbr.rel (0) target = $region33
  $region32: #{text_encoder_forward.8} parent=0 // pred_region
    _
  $region33: #{text_encoder_forward.8} parent=0 // pred_fallthru
    _
  // Predicated region
  $region34: #{text_encoder_forward.8} parent=0 // pred_check
    _
  $region35: #{text_encoder_forward.8} parent=0 // pred_check_branch
    %263 = sbr.rel (0) target = $region37
  $region36: #{text_encoder_forward.8} parent=0 // pred_region
    _
  $region37: #{text_encoder_forward.8} parent=0 // pred_fallthru
    _

// kernel: text_encoder_forward.7
$region0: #{text_encoder_forward.7}
  #allocation0 [shape = 'u32[]', space=smem, size = 0x4, offset = 0x4, fixed_abs, tag = 'smem constant byte address 0x4 - core index']
  #allocation1 [shape = 'u32[144,128]{1,0:T(1,128)}', space=vmem, size = 0x12000, scoped, tag = 'internal scratch']
  #allocation2 [shape = 'bf16[8,32]{1,0:T(8,128)(2,1)}', space=vmem, size = 0x800, scoped, tag = 'scratch operand']
  %s0 = inlined_call_operand.vmem [shape: bf16[16,32], index: 0, kind: input, shape index: {}, may-alias: {0,8}]
  %s1 = inlined_call_operand.vmem [shape: bf16[32,96], index: 1, kind: input, shape index: {}]
  %s2 = inlined_call_operand.vmem [shape: f32[1,96], index: 2, kind: input, shape index: {}]
  %s3 = inlined_call_operand.vmem [shape: f32[2,1,8], index: 3, kind: input, shape index: {}]
  %s4 = inlined_call_operand.vmem [shape: bf16[32,32], index: 4, kind: input, shape index: {}]
  %s5 = inlined_call_operand.vmem [shape: f32[1,32], index: 5, kind: input, shape index: {}]
  %s6 = inlined_call_operand.vmem [shape: f32[1,32], index: 6, kind: input, shape index: {}]
  %s7 = inlined_call_operand.vmem [shape: f32[1,32], index: 7, kind: input, shape index: {}]
  %s8 = inlined_call_operand.vmem [shape: bf16[16,32], index: 8, kind: output, shape index: {}, may-alias: {0,8}]
  %s9 = sld [smem:[#allocation0]]
  $region65: #{text_encoder_forward.7} parent=0
    _
  %s11 = ssub.s32 1, %s9
  %s12 = scalar_select 0, %s11, %s9
  loop: start=0, step=1, limit=4
  $region2: #{text_encoder_forward.7} parent=0 // loop_pre_header
    _
  $region3: #{text_encoder_forward.7} parent=0 // loop_header
    %s14 = sphi 0, %s18
    %p15 = scmp.ge.s32.totalorder %s14, 4
    %s24 = sphi 0, %s26
    %s27 = sphi 0, %s24
    %s28 = sphi 0, %s27
    %s44 = sphi 0, %s28
    %s48 = sphi 0, %s48
    %s50 = sphi 0, %s48
    %s51 = sphi 0, %s50
    %s65 = sphi 0, %s51
    %s69 = sphi 0, %s69
    %s71 = sphi 0, %s69
    %s72 = sphi 0, %s71
    %s86 = sphi 0, %s72
    %s92 = sphi 0, %s94
    %s95 = sphi 0, %s92
    %s96 = sphi 0, %s95
    %s112 = sphi 0, %s96
    %s116 = sphi 0, %s116
    %s118 = sphi 0, %s116
    %s119 = sphi 0, %s118
    %s133 = sphi 0, %s119
    %s137 = sphi 0, %s137
    %s139 = sphi 0, %s137
    %s140 = sphi 0, %s139
    %s154 = sphi 0, %s140
    %s158 = sphi 0, %s158
    %s160 = sphi 0, %s158
    %s161 = sphi 0, %s160
    %s175 = sphi 0, %s161
    %s179 = sphi 0, %s179
    %s181 = sphi 0, %s179
    %s182 = sphi 0, %s181
    %s196 = sphi 0, %s182
    %s202 = sphi 0, %s204
    %s205 = sphi 0, %s202
    %s206 = sphi 0, %s205
    %s222 = sphi 0, %s206
  $region4: #{text_encoder_forward.7} parent=0 // loop_header_branch
    %17 = sbr.rel (%p15) target = $region8
  $region5: #{text_encoder_forward.7} parent=0 // loop_body
    %s19 = ssub.s32 %s14, 1
    %s20 = ssub.s32 %s14, 2
    %s21 = sadd.s32 %s14, 1
    %s22 = ssub.s32 %s14, %s21
    %p23 = scmp.eq.s32.totalorder %s22, 0
    %s25 = sadd.s32 %s24, 1
    %s26 = scalar_select %p23, %s24, %s25
    %p29 = pneg %p23
    %p30 = scmp.eq.s32.totalorder %s14, 1
    %p31 = por %p29, %p30
    %p32 = scmp.ne.s32.totalorder %s24, %s27
    %p33 = scmp.eq.s32.totalorder %s14, 0
    %p34 = por %p32, %p33
    %p35 = scmp.ne.s32.totalorder %s24, %s27
    %p36 = scmp.eq.s32.totalorder %s19, 1
    %p37 = por %p35, %p36
    %p38 = scmp.ne.s32.totalorder %s27, %s28
    %p39 = scmp.eq.s32.totalorder %s19, 0
    %p40 = por %p38, %p39
    %p41 = scmp.ne.s32.totalorder %s27, %s28
    %p42 = scmp.eq.s32.totalorder %s20, 1
    %p43 = por %p41, %p42
    %p45 = scmp.ne.s32.totalorder %s28, %s44
    %p46 = scmp.eq.s32.totalorder %s20, 0
    %p47 = por %p45, %p46
    %s49 = sadd.s32 %s48, 1
    %p52 = scmp.eq.s32.totalorder %s14, 1
    %p53 = scmp.ne.s32.totalorder %s48, %s50
    %p54 = scmp.eq.s32.totalorder %s14, 0
    %p55 = por %p53, %p54
    %p56 = scmp.ne.s32.totalorder %s48, %s50
    %p57 = scmp.eq.s32.totalorder %s19, 1
    %p58 = por %p56, %p57
    %p59 = scmp.ne.s32.totalorder %s50, %s51
    %p60 = scmp.eq.s32.totalorder %s19, 0
    %p61 = por %p59, %p60
    %p62 = scmp.ne.s32.totalorder %s50, %s51
    %p63 = scmp.eq.s32.totalorder %s20, 1
    %p64 = por %p62, %p63
    %p66 = scmp.ne.s32.totalorder %s51, %s65
    %p67 = scmp.eq.s32.totalorder %s20, 0
    %p68 = por %p66, %p67
    %s70 = sadd.s32 %s69, 1
    %p73 = scmp.eq.s32.totalorder %s14, 1
    %p74 = scmp.ne.s32.totalorder %s69, %s71
    %p75 = scmp.eq.s32.totalorder %s14, 0
    %p76 = por %p74, %p75
    %p77 = scmp.ne.s32.totalorder %s69, %s71
    %p78 = scmp.eq.s32.totalorder %s19, 1
    %p79 = por %p77, %p78
    %p80 = scmp.ne.s32.totalorder %s71, %s72
    %p81 = scmp.eq.s32.totalorder %s19, 0
    %p82 = por %p80, %p81
    %p83 = scmp.ne.s32.totalorder %s71, %s72
    %p84 = scmp.eq.s32.totalorder %s20, 1
    %p85 = por %p83, %p84
    %p87 = scmp.ne.s32.totalorder %s72, %s86
    %p88 = scmp.eq.s32.totalorder %s20, 0
    %p89 = por %p87, %p88
    %s90 = ssub.s32 %s14, %s21
    %p91 = scmp.eq.s32.totalorder %s90, 0
    %s93 = sadd.s32 %s92, 1
    %s94 = scalar_select %p91, %s92, %s93
    %p97 = pneg %p91
    %p98 = scmp.eq.s32.totalorder %s14, 1
    %p99 = por %p97, %p98
    %p100 = scmp.ne.s32.totalorder %s92, %s95
    %p101 = scmp.eq.s32.totalorder %s14, 0
    %p102 = por %p100, %p101
    %p103 = scmp.ne.s32.totalorder %s92, %s95
    %p104 = scmp.eq.s32.totalorder %s19, 1
    %p105 = por %p103, %p104
    %p106 = scmp.ne.s32.totalorder %s95, %s96
    %p107 = scmp.eq.s32.totalorder %s19, 0
    %p108 = por %p106, %p107
    %p109 = scmp.ne.s32.totalorder %s95, %s96
    %p110 = scmp.eq.s32.totalorder %s20, 1
    %p111 = por %p109, %p110
    %p113 = scmp.ne.s32.totalorder %s96, %s112
    %p114 = scmp.eq.s32.totalorder %s20, 0
    %p115 = por %p113, %p114
    %s117 = sadd.s32 %s116, 1
    %p120 = scmp.eq.s32.totalorder %s14, 1
    %p121 = scmp.ne.s32.totalorder %s116, %s118
    %p122 = scmp.eq.s32.totalorder %s14, 0
    %p123 = por %p121, %p122
    %p124 = scmp.ne.s32.totalorder %s116, %s118
    %p125 = scmp.eq.s32.totalorder %s19, 1
    %p126 = por %p124, %p125
    %p127 = scmp.ne.s32.totalorder %s118, %s119
    %p128 = scmp.eq.s32.totalorder %s19, 0
    %p129 = por %p127, %p128
    %p130 = scmp.ne.s32.totalorder %s118, %s119
    %p131 = scmp.eq.s32.totalorder %s20, 1
    %p132 = por %p130, %p131
    %p134 = scmp.ne.s32.totalorder %s119, %s133
    %p135 = scmp.eq.s32.totalorder %s20, 0
    %p136 = por %p134, %p135
    %s138 = sadd.s32 %s137, 1
    %p141 = scmp.eq.s32.totalorder %s14, 1
    %p142 = scmp.ne.s32.totalorder %s137, %s139
    %p143 = scmp.eq.s32.totalorder %s14, 0
    %p144 = por %p142, %p143
    %p145 = scmp.ne.s32.totalorder %s137, %s139
    %p146 = scmp.eq.s32.totalorder %s19, 1
    %p147 = por %p145, %p146
    %p148 = scmp.ne.s32.totalorder %s139, %s140
    %p149 = scmp.eq.s32.totalorder %s19, 0
    %p150 = por %p148, %p149
    %p151 = scmp.ne.s32.totalorder %s139, %s140
    %p152 = scmp.eq.s32.totalorder %s20, 1
    %p153 = por %p151, %p152
    %p155 = scmp.ne.s32.totalorder %s140, %s154
    %p156 = scmp.eq.s32.totalorder %s20, 0
    %p157 = por %p155, %p156
    %s159 = sadd.s32 %s158, 1
    %p162 = scmp.eq.s32.totalorder %s14, 1
    %p163 = scmp.ne.s32.totalorder %s158, %s160
    %p164 = scmp.eq.s32.totalorder %s14, 0
    %p165 = por %p163, %p164
    %p166 = scmp.ne.s32.totalorder %s158, %s160
    %p167 = scmp.eq.s32.totalorder %s19, 1
    %p168 = por %p166, %p167
    %p169 = scmp.ne.s32.totalorder %s160, %s161
    %p170 = scmp.eq.s32.totalorder %s19, 0
    %p171 = por %p169, %p170
    %p172 = scmp.ne.s32.totalorder %s160, %s161
    %p173 = scmp.eq.s32.totalorder %s20, 1
    %p174 = por %p172, %p173
    %p176 = scmp.ne.s32.totalorder %s161, %s175
    %p177 = scmp.eq.s32.totalorder %s20, 0
    %p178 = por %p176, %p177
    %s180 = sadd.s32 %s179, 1
    %p183 = scmp.eq.s32.totalorder %s14, 1
    %p184 = scmp.ne.s32.totalorder %s179, %s181
    %p185 = scmp.eq.s32.totalorder %s14, 0
    %p186 = por %p184, %p185
    %p187 = scmp.ne.s32.totalorder %s179, %s181
    %p188 = scmp.eq.s32.totalorder %s19, 1
    %p189 = por %p187, %p188
    %p190 = scmp.ne.s32.totalorder %s181, %s182
    %p191 = scmp.eq.s32.totalorder %s19, 0
    %p192 = por %p190, %p191
    %p193 = scmp.ne.s32.totalorder %s181, %s182
    %p194 = scmp.eq.s32.totalorder %s20, 1
    %p195 = por %p193, %p194
    %p197 = scmp.ne.s32.totalorder %s182, %s196
    %p198 = scmp.eq.s32.totalorder %s20, 0
    %p199 = por %p197, %p198
    %s200 = ssub.s32 %s14, %s21
    %p201 = scmp.eq.s32.totalorder %s200, 0
    %s203 = sadd.s32 %s202, 1
    %s204 = scalar_select %p201, %s202, %s203
    %p207 = pneg %p201
    %p208 = scmp.eq.s32.totalorder %s14, 1
    %p209 = por %p207, %p208
    %p210 = scmp.ne.s32.totalorder %s202, %s205
    %p211 = scmp.eq.s32.totalorder %s14, 0
    %p212 = por %p210, %p211
    %p213 = scmp.ne.s32.totalorder %s202, %s205
    %p214 = scmp.eq.s32.totalorder %s19, 1
    %p215 = por %p213, %p214
    %p216 = scmp.ne.s32.totalorder %s205, %s206
    %p217 = scmp.eq.s32.totalorder %s19, 0
    %p218 = por %p216, %p217
    %p219 = scmp.ne.s32.totalorder %s205, %s206
    %p220 = scmp.eq.s32.totalorder %s20, 1
    %p221 = por %p219, %p220
    %p223 = scmp.ne.s32.totalorder %s206, %s222
    %p224 = scmp.eq.s32.totalorder %s20, 0
    %p225 = por %p223, %p224
    %p226 = scmp.le.s32.totalorder 1, %s14
    %p227 = scmp.lt.s32.totalorder %s14, 3
    %p228 = pnand %p226, %p227
    %p229 = pneg %p228
    // Predicated region
    $region9: #{text_encoder_forward.7} parent=5 // pred_check
      _
    $region10: #{text_encoder_forward.7} parent=5 // pred_check_branch
      %231 = sbr.rel (%p228) target = $region12
    $region11: #{text_encoder_forward.7} parent=5 // pred_region
      %s232 = ssub.s32 %s14, 1
      // Predicated region
      $region13: #{text_encoder_forward.7} parent=11 // pred_check
        %p233 = pneg %p61
      $region14: #{text_encoder_forward.7} parent=11 // pred_check_branch
        %235 = sbr.rel (%p233) target = $region16
      $region15: #{text_encoder_forward.7} parent=11 // pred_region
        _
      $region16: #{text_encoder_forward.7} parent=11 // pred_fallthru
        _
      // Predicated region
      $region17: #{text_encoder_forward.7} parent=11 // pred_check
        %p236 = pneg %p82
      $region18: #{text_encoder_forward.7} parent=11 // pred_check_branch
        %238 = sbr.rel (%p236) target = $region20
      $region19: #{text_encoder_forward.7} parent=11 // pred_region
        _
      $region20: #{text_encoder_forward.7} parent=11 // pred_fallthru
        _
      // Predicated region
      $region21: #{text_encoder_forward.7} parent=11 // pred_check
        %p239 = pneg %p129
      $region22: #{text_encoder_forward.7} parent=11 // pred_check_branch
        %241 = sbr.rel (%p239) target = $region24
      $region23: #{text_encoder_forward.7} parent=11 // pred_region
        _
      $region24: #{text_encoder_forward.7} parent=11 // pred_fallthru
        _
      // Predicated region
      $region25: #{text_encoder_forward.7} parent=11 // pred_check
        %p242 = pneg %p150
      $region26: #{text_encoder_forward.7} parent=11 // pred_check_branch
        %244 = sbr.rel (%p242) target = $region28
      $region27: #{text_encoder_forward.7} parent=11 // pred_region
        _
      $region28: #{text_encoder_forward.7} parent=11 // pred_fallthru
        _
      // Predicated region
      $region29: #{text_encoder_forward.7} parent=11 // pred_check
        %p245 = pneg %p171
      $region30: #{text_encoder_forward.7} parent=11 // pred_check_branch
        %247 = sbr.rel (%p245) target = $region32
      $region31: #{text_encoder_forward.7} parent=11 // pred_region
        _
      $region32: #{text_encoder_forward.7} parent=11 // pred_fallthru
        _
      // Predicated region
      $region33: #{text_encoder_forward.7} parent=11 // pred_check
        %p248 = pneg %p192
      $region34: #{text_encoder_forward.7} parent=11 // pred_check_branch
        %250 = sbr.rel (%p248) target = $region36
      $region35: #{text_encoder_forward.7} parent=11 // pred_region
        _
      $region36: #{text_encoder_forward.7} parent=11 // pred_fallthru
        _
    $region12: #{text_encoder_forward.7} parent=5 // pred_fallthru
      _
    %p251 = scmp.lt.s32.totalorder %s14, 2
    // Predicated region
    $region37: #{text_encoder_forward.7} parent=5 // pred_check
      %p252 = pneg %p251
    $region38: #{text_encoder_forward.7} parent=5 // pred_check_branch
      %254 = sbr.rel (%p252) target = $region40
    $region39: #{text_encoder_forward.7} parent=5 // pred_region
      // Predicated region
      $region41: #{text_encoder_forward.7} parent=39 // pred_check
        %p255 = pneg %p34
      $region42: #{text_encoder_forward.7} parent=39 // pred_check_branch
        %257 = sbr.rel (%p255) target = $region44
      $region43: #{text_encoder_forward.7} parent=39 // pred_region
        %p258 = scmp.lt.s32.totalorder %s14, 1
        %s259 = scalar_select %p258, %s14, 1
        %s260 = smul.addr %s259, 4
        %s261 = scalar_lea.vmem %s0, %s260
      $region44: #{text_encoder_forward.7} parent=39 // pred_fallthru
        _
      // Predicated region
      $region45: #{text_encoder_forward.7} parent=39 // pred_check
        %p262 = pneg %p102
      $region46: #{text_encoder_forward.7} parent=39 // pred_check_branch
        %264 = sbr.rel (%p262) target = $region48
      $region47: #{text_encoder_forward.7} parent=39 // pred_region
        %p265 = scmp.lt.s32.totalorder %s14, 1
        %s266 = scalar_select %p265, %s14, 1
        %s267 = scalar_lea.vmem %s3, %s266
      $region48: #{text_encoder_forward.7} parent=39 // pred_fallthru
        _
    $region40: #{text_encoder_forward.7} parent=5 // pred_fallthru
      _
    %p268 = scmp.le.s32.totalorder 1, %s14
    %p269 = scmp.lt.s32.totalorder %s14, 3
    %p270 = pnand %p268, %p269
    %p271 = pneg %p270
    // Predicated region
    $region49: #{text_encoder_forward.7} parent=5 // pred_check
      _
    $region50: #{text_encoder_forward.7} parent=5 // pred_check_branch
      %273 = sbr.rel (%p270) target = $region52
    $region51: #{text_encoder_forward.7} parent=5 // pred_region
      %s274 = ssub.s32 %s14, 1
      %p275 = scmp.lt.s32.totalorder %s19, 1
      %s276 = scalar_select %p275, %s19, 1
      %s277 = smul.addr %s276, 4
      %s278 = scalar_lea.vmem %s0, %s277
      %p279 = pneg %p40
      %p280 = pneg %p37
      %p281 = pneg %p61
      %p282 = pneg %p58
      %p283 = pneg %p82
      %p284 = pneg %p79
      %p285 = scmp.lt.s32.totalorder %s19, 1
      %s286 = scalar_select %p285, %s19, 1
      %s287 = scalar_lea.vmem %s3, %s286
      %p288 = pneg %p108
      %p289 = pneg %p105
      %p290 = pneg %p129
      %p291 = pneg %p126
      %p292 = pneg %p150
      %p293 = pneg %p147
      %p294 = pneg %p171
      %p295 = pneg %p168
      %p296 = pneg %p192
      %p297 = pneg %p189
      %p298 = pneg %p218
      %p299 = pneg %p215
      %p300 = scmp.lt.s32.totalorder %s19, 1
      %s301 = scalar_select %p300, %s19, 1
      %s302 = smul.addr %s301, 4
      %s303 = scalar_lea.vmem %s8, %s302
      %p304 = scmp.lt.s32.totalorder %s19, 1
      %s305 = scalar_select %p304, %s19, 1
      %s306 = smul.addr %s305, 4
      %s307 = scalar_lea.vmem %s0, %s306
      %p308 = scmp.lt.s32.totalorder %s19, 1
      %s309 = scalar_select %p308, %s19, 1
      %s310 = scalar_lea.vmem %s3, %s309
      %p311 = scmp.lt.s32.totalorder %s19, 1
      %s312 = scalar_select %p311, %s19, 1
      %s313 = smul.addr %s312, 4
      %s314 = scalar_lea.vmem %s8, %s313
      %v316 = vld [vmem:[%s307] sm:$0xf]
      %v317 = vld [vmem:[%s1] sm:$0xf]
      %v318 = vld [vmem:[%s1 + $0x4] sm:$0xf]
      %v319 = vld [vmem:[%s1 + $0x8] sm:$0xf]
      %v320 = vld [vmem:[%s1 + $0xc] sm:$0xf]
      %v321 = vld [vmem:[%s2] sm:$0x1]
      %v323 = vlaneseq
      %v324 = vshrl.u32 %v323, 7
      %v325 = vsub.s32 0, %v324
      %v326 = vrot.slane %v321, %v325
      %v332 = vunpack.c.l.b16 %v317
      %v333 = vunpack.c.l.b16 %v318
      %v334 = vunpack.c.l.b16 %v319
      %v335 = vunpack.c.l.b16 %v320
      %v336 = vpack.c.b16 %v333, %v332
      %v337 = vpack.c.b16 %v335, %v334
      %vm340 = vcmask 261120
      %v342 = vsel %vm340, %v316, 0
      %344 = vmatprep.subr.bf16.mxu0 0
      %345 = vmatpush1.bf16.msra.mxu0 0
      %346 = vmatprep.subr.bf16.mxu0 0
      %347 = vmatpush1.bf16.msra.mxu0 0
      %348 = vmatprep.subr.bf16.mxu0 0
      %349 = vmatpush1.bf16.msra.mxu0 0
      %350 = vmatprep.subr.bf16.mxu0 0
      %351 = vmatpush1.bf16.msra.mxu0 0
      %352 = vmatprep.subr.bf16.mxu0 0
      %353 = vmatpush1.bf16.msra.mxu0 0
      %354 = vmatprep.subr.bf16.mxu0 0
      %355 = vmatpush1.bf16.msra.mxu0 0
      %356 = vmatprep.subr.bf16.mxu0 0
      %357 = vmatpush1.bf16.msra.mxu0 %v337
      %358 = vmatprep.subr.bf16.mxu0 0
      %359 = vmatpush1.bf16.msra.mxu0 %v336
      %360 = vmatprep.subr.bf16.mxu0 0
      %361 = vmatpush2.bf16.msra.mxu0 0
      %362 = vmatprep.subr.bf16.mxu0 0
      %363 = vmatpush2.bf16.msra.mxu0 0
      %364 = vmatprep.subr.bf16.mxu0 0
      %365 = vmatpush2.bf16.msra.mxu0 0
      %366 = vmatprep.subr.bf16.mxu0 0
      %367 = vmatpush2.bf16.msra.mxu0 0
      %368 = vmatprep.subr.bf16.mxu0 0
      %369 = vmatpush2.bf16.msra.mxu0 0
      %370 = vmatprep.subr.bf16.mxu0 0
      %371 = vmatpush2.bf16.msra.mxu0 0
      %372 = vmatprep.subr.bf16.mxu0 0
      %373 = vmatpush2.bf16.msra.mxu0 0
      %374 = vmatprep.subr.bf16.mxu0 0
      %375 = vmatpush2.bf16.msra.mxu0 0
      %376 = vmatprep.mubr.bf16.mxu0 0
      %377 = vmatmul.mubr.bf16.gmra.mxu0 %v342
      %v378 = vpop.f32.mrf.mxu0
      %v379 = vadd.f32 %v326, %v378
      %v380 = vpop.f32.mrf.mxu0
      %v381 = vpop.f32.mrf.mxu0
      %v382 = vpop.f32.mrf.mxu0
      %383 = vdwg.mxu0
      %v384 = vpack.c.bf16 %v379, %v379
      %v385 = vld [vmem:[%s310] sm:$0x1]
      %v387 = vlaneseq
      %v388 = vshrl.u32 %v387, 7
      %v389 = vsub.s32 0, %v388
      %v390 = vrot.slane %v385, %v389
      %393 = vrot.lane.b32.xlu0 %v384, 96
      %v394 = vpop.permute.xlu0 %393
      %vm395 = vcmask 64512
      %v397 = vsel %vm395, %v384, 0
      %v400 = vsel %vm395, %v394, 0
      %402 = vmatprep.subr.bf16.mxu0 0
      %403 = vmatpush1.bf16.xpose.msra.mxu0 0
      %404 = vmatprep.subr.bf16.mxu0 0
      %405 = vmatpush1.bf16.xpose.msra.mxu0 0
      %406 = vmatprep.subr.bf16.mxu0 0
      %407 = vmatpush1.bf16.xpose.msra.mxu0 0
      %408 = vmatprep.subr.bf16.mxu0 0
      %409 = vmatpush1.bf16.xpose.msra.mxu0 0
      %410 = vmatprep.subr.bf16.mxu0 0
      %411 = vmatpush1.bf16.xpose.msra.mxu0 0
      %412 = vmatprep.subr.bf16.mxu0 0
      %413 = vmatpush1.bf16.xpose.msra.mxu0 0
      %414 = vmatprep.subr.bf16.mxu0 0
      %415 = vmatpush1.bf16.xpose.msra.mxu0 0
      %416 = vmatprep.subr.bf16.mxu0 0
      %417 = vmatpush1.bf16.xpose.msra.mxu0 %v400
      %418 = vmatprep.subr.bf16.mxu0 0
      %419 = vmatpush2.bf16.xpose.msra.mxu0 0
      %420 = vmatprep.subr.bf16.mxu0 0
      %421 = vmatpush2.bf16.xpose.msra.mxu0 0
      %422 = vmatprep.subr.bf16.mxu0 0
      %423 = vmatpush2.bf16.xpose.msra.mxu0 0
      %424 = vmatprep.subr.bf16.mxu0 0
      %425 = vmatpush2.bf16.xpose.msra.mxu0 0
      %426 = vmatprep.subr.bf16.mxu0 0
      %427 = vmatpush2.bf16.xpose.msra.mxu0 0
      %428 = vmatprep.subr.bf16.mxu0 0
      %429 = vmatpush2.bf16.xpose.msra.mxu0 0
      %430 = vmatprep.subr.bf16.mxu0 0
      %431 = vmatpush2.bf16.xpose.msra.mxu0 0
      %432 = vmatprep.subr.bf16.mxu0 0
      %433 = vmatpush2.bf16.xpose.msra.mxu0 0
      %434 = vmatprep.mubr.bf16.mxu0 0
      %435 = vmatmul.mubr.bf16.gmra.mxu0 %v397
      %v436 = vpop.f32.mrf.mxu0
      %v437 = vadd.f32 %v390, %v436
      %v438 = vpop.f32.mrf.mxu0
      %v439 = vpop.f32.mrf.mxu0
      %v440 = vpop.f32.mrf.mxu0
      %441 = vdwg.mxu0
      %v442 = vsel %vm395, %v437, -inf
      %443 = vmax.xlane.f32.xlu0 %v442
      %v444 = vpop.xlane.xlu0 %443
      %v445 = vsub.f32 %v437, %v444
      %v446 = vmul.f32 %v445, 1.442695
      %v447 = vpow.pop %v446
      %v448 = vsel %vm395, %v447, 0.0
      %449 = vadd.xlane.f32.xlu0 %v448
      %v450 = vpop.xlane.xlu0 %449
      %v451 = vrcp.pop %v450
      %v452 = vmul.f32 %v447, %v451
      %v453 = vpack.c.bf16 %v452, %v452
      %454 = vrot.lane.b32.xlu0 %v384, 64
      %v455 = vpop.permute.xlu0 %454
      %v457 = vsel %vm395, %v453, 0
      %vm459 = vcmask 1043456
      %v461 = vsel %vm459, %v455, 0
      %463 = vmatprep.subr.bf16.mxu0 0
      %464 = vmatpush1.bf16.msra.mxu0 0
      %465 = vmatprep.subr.bf16.mxu0 0
      %466 = vmatpush1.bf16.msra.mxu0 0
      %467 = vmatprep.subr.bf16.mxu0 0
      %468 = vmatpush1.bf16.msra.mxu0 0
      %469 = vmatprep.subr.bf16.mxu0 0
      %470 = vmatpush1.bf16.msra.mxu0 0
      %471 = vmatprep.subr.bf16.mxu0 0
      %472 = vmatpush1.bf16.msra.mxu0 0
      %473 = vmatprep.subr.bf16.mxu0 0
      %474 = vmatpush1.bf16.msra.mxu0 0
      %475 = vmatprep.subr.bf16.mxu0 0
      %476 = vmatpush1.bf16.msra.mxu0 0
      %477 = vmatprep.subr.bf16.mxu0 0
      %478 = vmatpush1.bf16.msra.mxu0 %v461
      %479 = vmatprep.subr.bf16.mxu0 0
      %480 = vmatpush2.bf16.msra.mxu0 0
      %481 = vmatprep.subr.bf16.mxu0 0
      %482 = vmatpush2.bf16.msra.mxu0 0
      %483 = vmatprep.subr.bf16.mxu0 0
      %484 = vmatpush2.bf16.msra.mxu0 0
      %485 = vmatprep.subr.bf16.mxu0 0
      %486 = vmatpush2.bf16.msra.mxu0 0
      %487 = vmatprep.subr.bf16.mxu0 0
      %488 = vmatpush2.bf16.msra.mxu0 0
      %489 = vmatprep.subr.bf16.mxu0 0
      %490 = vmatpush2.bf16.msra.mxu0 0
      %491 = vmatprep.subr.bf16.mxu0 0
      %492 = vmatpush2.bf16.msra.mxu0 0
      %493 = vmatprep.subr.bf16.mxu0 0
      %494 = vmatpush2.bf16.msra.mxu0 0
      %495 = vmatprep.mubr.bf16.mxu0 0
      %496 = vmatmul.mubr.bf16.gmra.mxu0 %v457
      %v497 = vpop.f32.mrf.mxu0
      %v498 = vadd.f32 0.0, %v497
      %v499 = vpop.f32.mrf.mxu0
      %v500 = vpop.f32.mrf.mxu0
      %v501 = vpop.f32.mrf.mxu0
      %502 = vdwg.mxu0
      %v503 = vpack.c.bf16 %v498, %v498
      %vm504 = vcmask 60416
      %505 = vst.msk [vmem:[#allocation2] sm:$0xf] %vm504, %v503
      %506 = vrot.lane.b32.xlu0 %v384, 120
      %v507 = vpop.permute.xlu0 %506
      %508 = vrot.lane.b32.xlu0 %v384, 88
      %v509 = vpop.permute.xlu0 %508
      %v511 = vsel %vm395, %v507, 0
      %v514 = vsel %vm395, %v509, 0
      %516 = vmatprep.subr.bf16.mxu0 0
      %517 = vmatpush1.bf16.xpose.msra.mxu0 0
      %518 = vmatprep.subr.bf16.mxu0 0
      %519 = vmatpush1.bf16.xpose.msra.mxu0 0
      %520 = vmatprep.subr.bf16.mxu0 0
      %521 = vmatpush1.bf16.xpose.msra.mxu0 0
      %522 = vmatprep.subr.bf16.mxu0 0
      %523 = vmatpush1.bf16.xpose.msra.mxu0 0
      %524 = vmatprep.subr.bf16.mxu0 0
      %525 = vmatpush1.bf16.xpose.msra.mxu0 0
      %526 = vmatprep.subr.bf16.mxu0 0
      %527 = vmatpush1.bf16.xpose.msra.mxu0 0
      %528 = vmatprep.subr.bf16.mxu0 0
      %529 = vmatpush1.bf16.xpose.msra.mxu0 0
      %530 = vmatprep.subr.bf16.mxu0 0
      %531 = vmatpush1.bf16.xpose.msra.mxu0 %v514
      %532 = vmatprep.subr.bf16.mxu0 0
      %533 = vmatpush2.bf16.xpose.msra.mxu0 0
      %534 = vmatprep.subr.bf16.mxu0 0
      %535 = vmatpush2.bf16.xpose.msra.mxu0 0
      %536 = vmatprep.subr.bf16.mxu0 0
      %537 = vmatpush2.bf16.xpose.msra.mxu0 0
      %538 = vmatprep.subr.bf16.mxu0 0
      %539 = vmatpush2.bf16.xpose.msra.mxu0 0
      %540 = vmatprep.subr.bf16.mxu0 0
      %541 = vmatpush2.bf16.xpose.msra.mxu0 0
      %542 = vmatprep.subr.bf16.mxu0 0
      %543 = vmatpush2.bf16.xpose.msra.mxu0 0
      %544 = vmatprep.subr.bf16.mxu0 0
      %545 = vmatpush2.bf16.xpose.msra.mxu0 0
      %546 = vmatprep.subr.bf16.mxu0 0
      %547 = vmatpush2.bf16.xpose.msra.mxu0 0
      %548 = vmatprep.mubr.bf16.mxu0 0
      %549 = vmatmul.mubr.bf16.gmra.mxu0 %v511
      %v550 = vpop.f32.mrf.mxu0
      %v551 = vadd.f32 %v390, %v550
      %v552 = vpop.f32.mrf.mxu0
      %v553 = vpop.f32.mrf.mxu0
      %v554 = vpop.f32.mrf.mxu0
      %555 = vdwg.mxu0
      %v556 = vsel %vm395, %v551, -inf
      %557 = vmax.xlane.f32.xlu0 %v556
      %v558 = vpop.xlane.xlu0 %557
      %v559 = vsub.f32 %v551, %v558
      %v560 = vmul.f32 %v559, 1.442695
      %v561 = vpow.pop %v560
      %v562 = vsel %vm395, %v561, 0.0
      %563 = vadd.xlane.f32.xlu0 %v562
      %v564 = vpop.xlane.xlu0 %563
      %v565 = vrcp.pop %v564
      %v566 = vmul.f32 %v561, %v565
      %v567 = vpack.c.bf16 %v566, %v566
      %568 = vrot.lane.b32.xlu0 %v384, 56
      %v569 = vpop.permute.xlu0 %568
      %v571 = vsel %vm395, %v567, 0
      %v574 = vsel %vm459, %v569, 0
      %576 = vmatprep.subr.bf16.mxu0 0
      %577 = vmatpush1.bf16.msra.mxu0 0
      %578 = vmatprep.subr.bf16.mxu0 0
      %579 = vmatpush1.bf16.msra.mxu0 0
      %580 = vmatprep.subr.bf16.mxu0 0
      %581 = vmatpush1.bf16.msra.mxu0 0
      %582 = vmatprep.subr.bf16.mxu0 0
      %583 = vmatpush1.bf16.msra.mxu0 0
      %584 = vmatprep.subr.bf16.mxu0 0
      %585 = vmatpush1.bf16.msra.mxu0 0
      %586 = vmatprep.subr.bf16.mxu0 0
      %587 = vmatpush1.bf16.msra.mxu0 0
      %588 = vmatprep.subr.bf16.mxu0 0
      %589 = vmatpush1.bf16.msra.mxu0 0
      %590 = vmatprep.subr.bf16.mxu0 0
      %591 = vmatpush1.bf16.msra.mxu0 %v574
      %592 = vmatprep.subr.bf16.mxu0 0
      %593 = vmatpush2.bf16.msra.mxu0 0
      %594 = vmatprep.subr.bf16.mxu0 0
      %595 = vmatpush2.bf16.msra.mxu0 0
      %596 = vmatprep.subr.bf16.mxu0 0
      %597 = vmatpush2.bf16.msra.mxu0 0
      %598 = vmatprep.subr.bf16.mxu0 0
      %599 = vmatpush2.bf16.msra.mxu0 0
      %600 = vmatprep.subr.bf16.mxu0 0
      %601 = vmatpush2.bf16.msra.mxu0 0
      %602 = vmatprep.subr.bf16.mxu0 0
      %603 = vmatpush2.bf16.msra.mxu0 0
      %604 = vmatprep.subr.bf16.mxu0 0
      %605 = vmatpush2.bf16.msra.mxu0 0
      %606 = vmatprep.subr.bf16.mxu0 0
      %607 = vmatpush2.bf16.msra.mxu0 0
      %608 = vmatprep.mubr.bf16.mxu0 0
      %609 = vmatmul.mubr.bf16.gmra.mxu0 %v571
      %v610 = vpop.f32.mrf.mxu0
      %v611 = vadd.f32 0.0, %v610
      %v612 = vpop.f32.mrf.mxu0
      %v613 = vpop.f32.mrf.mxu0
      %v614 = vpop.f32.mrf.mxu0
      %615 = vdwg.mxu0
      %v616 = vpack.c.bf16 %v611, %v611
      %v618 = vunpack.c.l.b16 %v616
      %v619 = vpack.c.b16 %v618, %v618
      %620 = vrot.lane.b32.xlu0 %v619, 8
      %v621 = vpop.permute.xlu0 %620
      %vm623 = vcmask 126016
      %624 = vst.msk [vmem:[#allocation2] sm:$0xf] %vm623, %v621
      %625 = vrot.lane.b32.xlu0 %v384, 112
      %v626 = vpop.permute.xlu0 %625
      %627 = vrot.lane.b32.xlu0 %v384, 80
      %v628 = vpop.permute.xlu0 %627
      %v630 = vsel %vm395, %v626, 0
      %v633 = vsel %vm395, %v628, 0
      %635 = vmatprep.subr.bf16.mxu0 0
      %636 = vmatpush1.bf16.xpose.msra.mxu0 0
      %637 = vmatprep.subr.bf16.mxu0 0
      %638 = vmatpush1.bf16.xpose.msra.mxu0 0
      %639 = vmatprep.subr.bf16.mxu0 0
      %640 = vmatpush1.bf16.xpose.msra.mxu0 0
      %641 = vmatprep.subr.bf16.mxu0 0
      %642 = vmatpush1.bf16.xpose.msra.mxu0 0
      %643 = vmatprep.subr.bf16.mxu0 0
      %644 = vmatpush1.bf16.xpose.msra.mxu0 0
      %645 = vmatprep.subr.bf16.mxu0 0
      %646 = vmatpush1.bf16.xpose.msra.mxu0 0
      %647 = vmatprep.subr.bf16.mxu0 0
      %648 = vmatpush1.bf16.xpose.msra.mxu0 0
      %649 = vmatprep.subr.bf16.mxu0 0
      %650 = vmatpush1.bf16.xpose.msra.mxu0 %v633
      %651 = vmatprep.subr.bf16.mxu0 0
      %652 = vmatpush2.bf16.xpose.msra.mxu0 0
      %653 = vmatprep.subr.bf16.mxu0 0
      %654 = vmatpush2.bf16.xpose.msra.mxu0 0
      %655 = vmatprep.subr.bf16.mxu0 0
      %656 = vmatpush2.bf16.xpose.msra.mxu0 0
      %657 = vmatprep.subr.bf16.mxu0 0
      %658 = vmatpush2.bf16.xpose.msra.mxu0 0
      %659 = vmatprep.subr.bf16.mxu0 0
      %660 = vmatpush2.bf16.xpose.msra.mxu0 0
      %661 = vmatprep.subr.bf16.mxu0 0
      %662 = vmatpush2.bf16.xpose.msra.mxu0 0
      %663 = vmatprep.subr.bf16.mxu0 0
      %664 = vmatpush2.bf16.xpose.msra.mxu0 0
      %665 = vmatprep.subr.bf16.mxu0 0
      %666 = vmatpush2.bf16.xpose.msra.mxu0 0
      %667 = vmatprep.mubr.bf16.mxu0 0
      %668 = vmatmul.mubr.bf16.gmra.mxu0 %v630
      %v669 = vpop.f32.mrf.mxu0
      %v670 = vadd.f32 %v390, %v669
      %v671 = vpop.f32.mrf.mxu0
      %v672 = vpop.f32.mrf.mxu0
      %v673 = vpop.f32.mrf.mxu0
      %674 = vdwg.mxu0
      %v675 = vsel %vm395, %v670, -inf
      %676 = vmax.xlane.f32.xlu0 %v675
      %v677 = vpop.xlane.xlu0 %676
      %v678 = vsub.f32 %v670, %v677
      %v679 = vmul.f32 %v678, 1.442695
      %v680 = vpow.pop %v679
      %v681 = vsel %vm395, %v680, 0.0
      %682 = vadd.xlane.f32.xlu0 %v681
      %v683 = vpop.xlane.xlu0 %682
      %v684 = vrcp.pop %v683
      %v685 = vmul.f32 %v680, %v684
      %v686 = vpack.c.bf16 %v685, %v685
      %687 = vrot.lane.b32.xlu0 %v384, 48
      %v688 = vpop.permute.xlu0 %687
      %v690 = vsel %vm395, %v686, 0
      %v693 = vsel %vm459, %v688, 0
      %695 = vmatprep.subr.bf16.mxu0 0
      %696 = vmatpush1.bf16.msra.mxu0 0
      %697 = vmatprep.subr.bf16.mxu0 0
      %698 = vmatpush1.bf16.msra.mxu0 0
      %699 = vmatprep.subr.bf16.mxu0 0
      %700 = vmatpush1.bf16.msra.mxu0 0
      %701 = vmatprep.subr.bf16.mxu0 0
      %702 = vmatpush1.bf16.msra.mxu0 0
      %703 = vmatprep.subr.bf16.mxu0 0
      %704 = vmatpush1.bf16.msra.mxu0 0
      %705 = vmatprep.subr.bf16.mxu0 0
      %706 = vmatpush1.bf16.msra.mxu0 0
      %707 = vmatprep.subr.bf16.mxu0 0
      %708 = vmatpush1.bf16.msra.mxu0 0
      %709 = vmatprep.subr.bf16.mxu0 0
      %710 = vmatpush1.bf16.msra.mxu0 %v693
      %711 = vmatprep.subr.bf16.mxu0 0
      %712 = vmatpush2.bf16.msra.mxu0 0
      %713 = vmatprep.subr.bf16.mxu0 0
      %714 = vmatpush2.bf16.msra.mxu0 0
      %715 = vmatprep.subr.bf16.mxu0 0
      %716 = vmatpush2.bf16.msra.mxu0 0
      %717 = vmatprep.subr.bf16.mxu0 0
      %718 = vmatpush2.bf16.msra.mxu0 0
      %719 = vmatprep.subr.bf16.mxu0 0
      %720 = vmatpush2.bf16.msra.mxu0 0
      %721 = vmatprep.subr.bf16.mxu0 0
      %722 = vmatpush2.bf16.msra.mxu0 0
      %723 = vmatprep.subr.bf16.mxu0 0
      %724 = vmatpush2.bf16.msra.mxu0 0
      %725 = vmatprep.subr.bf16.mxu0 0
      %726 = vmatpush2.bf16.msra.mxu0 0
      %727 = vmatprep.mubr.bf16.mxu0 0
      %728 = vmatmul.mubr.bf16.gmra.mxu0 %v690
      %v729 = vpop.f32.mrf.mxu0
      %v730 = vadd.f32 0.0, %v729
      %v731 = vpop.f32.mrf.mxu0
      %v732 = vpop.f32.mrf.mxu0
      %v733 = vpop.f32.mrf.mxu0
      %734 = vdwg.mxu0
      %v735 = vpack.c.bf16 %v730, %v730
      %v737 = vunpack.c.l.b16 %v735
      %v738 = vpack.c.b16 %v737, %v737
      %739 = vrot.lane.b32.xlu0 %v738, 16
      %v740 = vpop.permute.xlu0 %739
      %vm742 = vcmask 191616
      %743 = vst.msk [vmem:[#allocation2] sm:$0xf] %vm742, %v740
      %744 = vrot.lane.b32.xlu0 %v384, 104
      %v745 = vpop.permute.xlu0 %744
      %746 = vrot.lane.b32.xlu0 %v384, 72
      %v747 = vpop.permute.xlu0 %746
      %v749 = vsel %vm395, %v745, 0
      %v752 = vsel %vm395, %v747, 0
      %754 = vmatprep.subr.bf16.mxu0 0
      %755 = vmatpush1.bf16.xpose.msra.mxu0 0
      %756 = vmatprep.subr.bf16.mxu0 0
      %757 = vmatpush1.bf16.xpose.msra.mxu0 0
      %758 = vmatprep.subr.bf16.mxu0 0
      %759 = vmatpush1.bf16.xpose.msra.mxu0 0
      %760 = vmatprep.subr.bf16.mxu0 0
      %761 = vmatpush1.bf16.xpose.msra.mxu0 0
      %762 = vmatprep.subr.bf16.mxu0 0
      %763 = vmatpush1.bf16.xpose.msra.mxu0 0
      %764 = vmatprep.subr.bf16.mxu0 0
      %765 = vmatpush1.bf16.xpose.msra.mxu0 0
      %766 = vmatprep.subr.bf16.mxu0 0
      %767 = vmatpush1.bf16.xpose.msra.mxu0 0
      %768 = vmatprep.subr.bf16.mxu0 0
      %769 = vmatpush1.bf16.xpose.msra.mxu0 %v752
      %770 = vmatprep.subr.bf16.mxu0 0
      %771 = vmatpush2.bf16.xpose.msra.mxu0 0
      %772 = vmatprep.subr.bf16.mxu0 0
      %773 = vmatpush2.bf16.xpose.msra.mxu0 0
      %774 = vmatprep.subr.bf16.mxu0 0
      %775 = vmatpush2.bf16.xpose.msra.mxu0 0
      %776 = vmatprep.subr.bf16.mxu0 0
      %777 = vmatpush2.bf16.xpose.msra.mxu0 0
      %778 = vmatprep.subr.bf16.mxu0 0
      %779 = vmatpush2.bf16.xpose.msra.mxu0 0
      %780 = vmatprep.subr.bf16.mxu0 0
      %781 = vmatpush2.bf16.xpose.msra.mxu0 0
      %782 = vmatprep.subr.bf16.mxu0 0
      %783 = vmatpush2.bf16.xpose.msra.mxu0 0
      %784 = vmatprep.subr.bf16.mxu0 0
      %785 = vmatpush2.bf16.xpose.msra.mxu0 0
      %786 = vmatprep.mubr.bf16.mxu0 0
      %787 = vmatmul.mubr.bf16.gmra.mxu0 %v749
      %v788 = vpop.f32.mrf.mxu0
      %v789 = vadd.f32 %v390, %v788
      %v790 = vpop.f32.mrf.mxu0
      %v791 = vpop.f32.mrf.mxu0
      %v792 = vpop.f32.mrf.mxu0
      %793 = vdwg.mxu0
      %v794 = vsel %vm395, %v789, -inf
      %795 = vmax.xlane.f32.xlu0 %v794
      %v796 = vpop.xlane.xlu0 %795
      %v797 = vsub.f32 %v789, %v796
      %v798 = vmul.f32 %v797, 1.442695
      %v799 = vpow.pop %v798
      %v800 = vsel %vm395, %v799, 0.0
      %801 = vadd.xlane.f32.xlu0 %v800
      %v802 = vpop.xlane.xlu0 %801
      %v803 = vrcp.pop %v802
      %v804 = vmul.f32 %v799, %v803
      %v805 = vpack.c.bf16 %v804, %v804
      %806 = vrot.lane.b32.xlu0 %v384, 40
      %v807 = vpop.permute.xlu0 %806
      %v809 = vsel %vm395, %v805, 0
      %v812 = vsel %vm459, %v807, 0
      %814 = vmatprep.subr.bf16.mxu0 0
      %815 = vmatpush1.bf16.msra.mxu0 0
      %816 = vmatprep.subr.bf16.mxu0 0
      %817 = vmatpush1.bf16.msra.mxu0 0
      %818 = vmatprep.subr.bf16.mxu0 0
      %819 = vmatpush1.bf16.msra.mxu0 0
      %820 = vmatprep.subr.bf16.mxu0 0
      %821 = vmatpush1.bf16.msra.mxu0 0
      %822 = vmatprep.subr.bf16.mxu0 0
      %823 = vmatpush1.bf16.msra.mxu0 0
      %824 = vmatprep.subr.bf16.mxu0 0
      %825 = vmatpush1.bf16.msra.mxu0 0
      %826 = vmatprep.subr.bf16.mxu0 0
      %827 = vmatpush1.bf16.msra.mxu0 0
      %828 = vmatprep.subr.bf16.mxu0 0
      %829 = vmatpush1.bf16.msra.mxu0 %v812
      %830 = vmatprep.subr.bf16.mxu0 0
      %831 = vmatpush2.bf16.msra.mxu0 0
      %832 = vmatprep.subr.bf16.mxu0 0
      %833 = vmatpush2.bf16.msra.mxu0 0
      %834 = vmatprep.subr.bf16.mxu0 0
      %835 = vmatpush2.bf16.msra.mxu0 0
      %836 = vmatprep.subr.bf16.mxu0 0
      %837 = vmatpush2.bf16.msra.mxu0 0
      %838 = vmatprep.subr.bf16.mxu0 0
      %839 = vmatpush2.bf16.msra.mxu0 0
      %840 = vmatprep.subr.bf16.mxu0 0
      %841 = vmatpush2.bf16.msra.mxu0 0
      %842 = vmatprep.subr.bf16.mxu0 0
      %843 = vmatpush2.bf16.msra.mxu0 0
      %844 = vmatprep.subr.bf16.mxu0 0
      %845 = vmatpush2.bf16.msra.mxu0 0
      %846 = vmatprep.mubr.bf16.mxu0 0
      %847 = vmatmul.mubr.bf16.gmra.mxu0 %v809
      %v848 = vpop.f32.mrf.mxu0
      %v849 = vadd.f32 0.0, %v848
      %v850 = vpop.f32.mrf.mxu0
      %v851 = vpop.f32.mrf.mxu0
      %v852 = vpop.f32.mrf.mxu0
      %853 = vdwg.mxu0
      %v854 = vpack.c.bf16 %v849, %v849
      %v856 = vunpack.c.l.b16 %v854
      %v857 = vpack.c.b16 %v856, %v856
      %858 = vrot.lane.b32.xlu0 %v857, 24
      %v859 = vpop.permute.xlu0 %858
      %vm861 = vcmask 257216
      %862 = vst.msk [vmem:[#allocation2] sm:$0xf] %vm861, %v859
      %v863 = vld [vmem:[#allocation2] sm:$0xf]
      %v864 = vld [vmem:[%s4] sm:$0xf]
      %v865 = vld [vmem:[%s4 + $0x4] sm:$0xf]
      %v866 = vld [vmem:[%s4 + $0x8] sm:$0xf]
      %v867 = vld [vmem:[%s4 + $0xc] sm:$0xf]
      %v868 = vld [vmem:[%s5] sm:$0x1]
      %v870 = vlaneseq
      %v871 = vshrl.u32 %v870, 7
      %v872 = vsub.s32 0, %v871
      %v873 = vrot.slane %v868, %v872
      %v879 = vunpack.c.l.b16 %v864
      %v880 = vunpack.c.l.b16 %v865
      %v881 = vunpack.c.l.b16 %v866
      %v882 = vunpack.c.l.b16 %v867
      %v883 = vpack.c.b16 %v880, %v879
      %v884 = vpack.c.b16 %v882, %v881
      %v888 = vsel %vm340, %v863, 0
      %890 = vmatprep.subr.bf16.mxu0 0
      %891 = vmatpush1.bf16.msra.mxu0 0
      %892 = vmatprep.subr.bf16.mxu0 0
      %893 = vmatpush1.bf16.msra.mxu0 0
      %894 = vmatprep.subr.bf16.mxu0 0
      %895 = vmatpush1.bf16.msra.mxu0 0
      %896 = vmatprep.subr.bf16.mxu0 0
      %897 = vmatpush1.bf16.msra.mxu0 0
      %898 = vmatprep.subr.bf16.mxu0 0
      %899 = vmatpush1.bf16.msra.mxu0 0
      %900 = vmatprep.subr.bf16.mxu0 0
      %901 = vmatpush1.bf16.msra.mxu0 0
      %902 = vmatprep.subr.bf16.mxu0 0
      %903 = vmatpush1.bf16.msra.mxu0 %v884
      %904 = vmatprep.subr.bf16.mxu0 0
      %905 = vmatpush1.bf16.msra.mxu0 %v883
      %906 = vmatprep.subr.bf16.mxu0 0
      %907 = vmatpush2.bf16.msra.mxu0 0
      %908 = vmatprep.subr.bf16.mxu0 0
      %909 = vmatpush2.bf16.msra.mxu0 0
      %910 = vmatprep.subr.bf16.mxu0 0
      %911 = vmatpush2.bf16.msra.mxu0 0
      %912 = vmatprep.subr.bf16.mxu0 0
      %913 = vmatpush2.bf16.msra.mxu0 0
      %914 = vmatprep.subr.bf16.mxu0 0
      %915 = vmatpush2.bf16.msra.mxu0 0
      %916 = vmatprep.subr.bf16.mxu0 0
      %917 = vmatpush2.bf16.msra.mxu0 0
      %918 = vmatprep.subr.bf16.mxu0 0
      %919 = vmatpush2.bf16.msra.mxu0 0
      %920 = vmatprep.subr.bf16.mxu0 0
      %921 = vmatpush2.bf16.msra.mxu0 0
      %922 = vmatprep.mubr.bf16.mxu0 0
      %923 = vmatmul.mubr.bf16.gmra.mxu0 %v888
      %v924 = vpop.f32.mrf.mxu0
      %v925 = vadd.f32 %v873, %v924
      %v926 = vpop.f32.mrf.mxu0
      %v927 = vpop.f32.mrf.mxu0
      %v928 = vpop.f32.mrf.mxu0
      %929 = vdwg.mxu0
      %v930 = vunpack.c.l.bf16 %v316
      %v931 = vadd.f32 %v925, %v930
      %v932 = vsel %vm340, %v931, 0.0
      %933 = vadd.xlane.f32.xlu0 %v932
      %v934 = vpop.xlane.xlu0 %933
      %v935 = vrcp.pop 32.0
      %v936 = vmul.f32 %v934, %v935
      %v937 = vsub.f32 %v931, %v936
      %v938 = vmul.f32 %v937, %v937
      %v939 = vsel %vm340, %v938, 0.0
      %940 = vadd.xlane.f32.xlu0 %v939
      %v941 = vpop.xlane.xlu0 %940
      %v942 = vmul.f32 %v941, %v935
      %v943 = vadd.f32 %v942, 1e-12
      %v944 = vrsqrt.pop %v943
      %v945 = vmul.f32 %v937, %v944
      %v946 = vld [vmem:[%s6] sm:$0x1]
      %v948 = vlaneseq
      %v949 = vshrl.u32 %v948, 7
      %v950 = vsub.s32 0, %v949
      %v951 = vrot.slane %v946, %v950
      %v953 = vmul.f32 %v945, %v951
      %v954 = vld [vmem:[%s7] sm:$0x1]
      %v956 = vlaneseq
      %v957 = vshrl.u32 %v956, 7
      %v958 = vsub.s32 0, %v957
      %v959 = vrot.slane %v954, %v958
      %v961 = vadd.f32 %v953, %v959
      %v962 = vpack.c.bf16 %v961, %v961
      %vm963 = vcmask 257024
      %964 = vst.msk [vmem:[%s314] sm:$0xf] %vm963, %v962
      %p965 = scmp.lt.s32.totalorder %s19, 1
      %s966 = scalar_select %p965, %s19, 1
      %s967 = smul.addr %s966, 4
      %s968 = scalar_lea.vmem %s8, %s967
      // Predicated region
      $region53: #{text_encoder_forward.7} parent=51 // pred_check
        %p969 = pneg %p215
      $region54: #{text_encoder_forward.7} parent=51 // pred_check_branch
        %971 = sbr.rel (%p969) target = $region56
      $region55: #{text_encoder_forward.7} parent=51 // pred_region
        _
      $region56: #{text_encoder_forward.7} parent=51 // pred_fallthru
        _
    $region52: #{text_encoder_forward.7} parent=5 // pred_fallthru
      _
    %p972 = scmp.le.s32.totalorder 2, %s14
    // Predicated region
    $region57: #{text_encoder_forward.7} parent=5 // pred_check
      %p973 = pneg %p972
    $region58: #{text_encoder_forward.7} parent=5 // pred_check_branch
      %975 = sbr.rel (%p973) target = $region60
    $region59: #{text_encoder_forward.7} parent=5 // pred_region
      %s976 = ssub.s32 %s14, 2
      // Predicated region
      $region61: #{text_encoder_forward.7} parent=59 // pred_check
        %p977 = pneg %p221
      $region62: #{text_encoder_forward.7} parent=59 // pred_check_branch
        %979 = sbr.rel (%p977) target = $region64
      $region63: #{text_encoder_forward.7} parent=59 // pred_region
        %p980 = scmp.lt.s32.totalorder %s20, 1
        %s981 = scalar_select %p980, %s20, 1
        %s982 = smul.addr %s981, 4
        %s983 = scalar_lea.vmem %s8, %s982
      $region64: #{text_encoder_forward.7} parent=59 // pred_fallthru
        _
    $region60: #{text_encoder_forward.7} parent=5 // pred_fallthru
      _
  $region6: #{text_encoder_forward.7} parent=0 // loop_footer
    %s18 = sadd.s32 1, %s14
  $region7: #{text_encoder_forward.7} parent=0 // loop_footer_branch
    %13 = sbr.rel target = $region3
  $region8: #{text_encoder_forward.7} parent=0 // loop_exit
    _

</llo_original>
